<compile_context>
chip_gen: v6e
topology: v6e:2x2x1
jax: 0.10.0
libtpu: 0.0.40
codegen_flags: <defaults>
</compile_context>

<pallas_src>
import jax
import jax.numpy as jnp
from jax import lax
from jax.experimental import pallas as pl
from jax.experimental.pallas import tpu as pltpu

_LANE = 128
_SUBLANE = 8


def _round_up(n, m):
    return (n + m - 1) // m * m


def _pick_row_tile(cols, itemsize):
    # Per NU-chunk live intermediates: int32 iota + compare mask + selected
    # values, each ~(TR, 128, cols). Keep their sum under ~4 MiB so the chunk
    # stays in vregs/VMEM without spilling (also safe for v7x's smaller
    # 64 MiB physical / 32 MiB scoped VMEM and v5e's 16 MiB scoped default).
    budget = 4 * 1024 * 1024
    per_row = _LANE * cols * (4 + 4 + itemsize)
    tr = (budget // max(per_row, 1)) // _SUBLANE * _SUBLANE
    return int(max(_SUBLANE, min(tr, 64)))


def _gather_rows_kernel(idx_ref, x_ref, out_ref):
    """out[r, j] = x[r, idx[r, j]] for one row tile.

    Gather is a fused compare/select + cross-lane reduce, processed in
    128-lane chunks of the index axis so only a (TR, 128, C) intermediate is
    live at a time.
    """
    x = x_ref[...]                                  # (TR, C), x.dtype
    tr, c = x.shape
    nu_pad = out_ref.shape[1]
    n_chunks = nu_pad // _LANE

    # Hoisted out of the chunk loop (JAX does not CSE broadcast_in_dim).
    col_ids = lax.broadcasted_iota(jnp.int32, (tr, _LANE, c), 2)
    x_b = x[:, None, :]                             # (TR, 1, C)
    zero = jnp.zeros((), x.dtype)

    def chunk_body(ci, carry):
        start = pl.multiple_of(ci * _LANE, _LANE)
        idx_chunk = idx_ref[:, pl.ds(start, _LANE)]            # (TR, 128) i32
        # one-hot select: exact because indices within a row are unique.
        sel = jnp.where(idx_chunk[:, :, None] == col_ids, x_b, zero)
        out_ref[:, pl.ds(start, _LANE)] = jnp.sum(sel, axis=-1).astype(
            out_ref.dtype
        )
        return carry

    lax.fori_loop(0, n_chunks, chunk_body, 0, unroll=True)


def _pallas_row_gather(x, idx):
    """unmasked_data = x[arange(rows)[:, None], idx] via a row-tiled kernel."""
    rows, cols = x.shape
    nu = idx.shape[1]
    itemsize = jnp.dtype(x.dtype).itemsize

    nu_pad = _round_up(nu, _LANE)                   # lane-dense output stores
    tr = _pick_row_tile(cols, itemsize)             # multiple of 8 (f32 tile)
    rows_pad = _round_up(rows, tr)

    if rows_pad != rows:
        x = jnp.pad(x, ((0, rows_pad - rows), (0, 0)))
    if rows_pad != rows or nu_pad != nu:
        idx = jnp.pad(idx, ((0, rows_pad - rows), (0, nu_pad - nu)))

    grid = (rows_pad // tr,)

    # compare + select + add per (row, out-col, col) element.
    flops = 3 * rows_pad * nu_pad * cols
    bytes_accessed = (
        rows_pad * cols * itemsize          # x read
        + rows_pad * nu_pad * 4             # idx read
        + rows_pad * nu_pad * itemsize      # out write
    )

    out = pl.pallas_call(
        _gather_rows_kernel,
        out_shape=jax.ShapeDtypeStruct((rows_pad, nu_pad), x.dtype),
        grid=grid,
        in_specs=[
            pl.BlockSpec((tr, nu_pad), lambda i: (i, 0)),   # indices
            pl.BlockSpec((tr, cols), lambda i: (i, 0)),     # x (full col span)
        ],
        out_specs=pl.BlockSpec((tr, nu_pad), lambda i: (i, 0)),
        compiler_params=pltpu.CompilerParams(
            dimension_semantics=("parallel",),
        ),
        cost_estimate=pl.CostEstimate(
            flops=int(flops),
            transcendentals=0,
            bytes_accessed=int(bytes_accessed),
        ),
    )(idx, x)

    return out[:rows, :nu]


def masker_forward(x, key, mask_pct=0.5, use_pallas=None):
    """JAX/Pallas equivalent of Masker.forward (zero_masking)."""
    rows, cols = x.shape
    num_masked = int(cols * mask_pct)
    num_unmasked = cols - num_masked

    # --- glue: per-row random permutation + sorted splits (plain JAX) ---
    # TODO(synk): torch.randperm/torch.sort have no in-kernel Pallas
    # equivalent; a single batched argsort of uniform noise yields i.i.d.
    # per-row permutations and fuses far better than vmapped permutation.
    noise = jax.random.uniform(key, (rows, cols))
    shuffled = jnp.argsort(noise, axis=1).astype(jnp.int32)
    masked_indices = jnp.sort(shuffled[:, :num_masked], axis=1)
    unmasked_indices = jnp.sort(shuffled[:, num_masked:], axis=1)

    # masked_data is all-zeros by definition: build it in the wrapper, not in
    # the kernel (saves an output pipeline + HBM writeback).
    masked_data = jnp.zeros((rows, num_masked), dtype=x.dtype)

    if use_pallas is None:
        # pallas_call launch overhead dwarfs the work for sub-vreg problems.
        use_pallas = rows * num_unmasked * cols >= 8 * 128 * 128

    if num_unmasked == 0:
        unmasked_data = jnp.zeros((rows, 0), dtype=x.dtype)
    elif not use_pallas:
        unmasked_data = jnp.take_along_axis(x, unmasked_indices, axis=1)
    else:
        unmasked_data = _pallas_row_gather(x, unmasked_indices)

    return masked_data, masked_indices, unmasked_data, unmasked_indices


if __name__ == "__main__":
    key = jax.random.PRNGKey(0)
    kx, kperm = jax.random.split(key)

    # Small but TPU-tile-friendly 2-D shapes consistent with the module:
    # rows multiple of 8, cols multiple of 128 -> num_unmasked = 128 is
    # lane-dense, row tile TR=8 gives a 2-step parallel grid.
    rows, cols = 16, 256
    mask_pct = 0.5
    x = jax.random.normal(kx, (rows, cols), dtype=jnp.float32)

    masked_data, masked_indices, unmasked_data, unmasked_indices = (
        masker_forward(x, kperm, mask_pct, use_pallas=True)
    )
    jax.block_until_ready(
        (masked_data, masked_indices, unmasked_data, unmasked_indices)
    )

    num_masked = int(cols * mask_pct)
    num_unmasked = cols - num_masked

    # correctness checks against a pure-JAX reference of the gather
    ref_unmasked = jnp.take_along_axis(x, unmasked_indices, axis=1)
    assert masked_data.shape == (rows, num_masked)
    assert masked_indices.shape == (rows, num_masked)
    assert unmasked_data.shape == (rows, num_unmasked)
    assert unmasked_indices.shape == (rows, num_unmasked)
    assert jnp.allclose(unmasked_data, ref_unmasked, atol=1e-6)
    assert jnp.all(masked_data == 0)
    # masked + unmasked indices form a permutation of [0, cols) per row
    all_idx = jnp.sort(
        jnp.concatenate([masked_indices, unmasked_indices], axis=1), axis=1
    )
    assert jnp.all(all_idx == jnp.arange(cols, dtype=jnp.int32)[None, :])

    print("KERNEL_OK")
</pallas_src>

<mosaic_0001>
module attributes {stable_mosaic.version = 11 : i64} {
  func.func @_gather_rows_kernel(%arg0: i32, %arg1: memref<8x128xi32, #tpu.memory_space<vmem>>, %arg2: memref<8x256xf32, #tpu.memory_space<vmem>>, %arg3: memref<8x128xf32, #tpu.memory_space<vmem>>) attributes {dimension_semantics = [#tpu.dimension_semantics<parallel>], iteration_bounds = array<i64: 2>, scalar_prefetch = 0 : i64, scratch_operands = 0 : i64, tpu.core_type = #tpu.core_type<tc>, window_params = [{transform_indices = @transform_0, window_bounds = array<i64: 8, 128>}, {transform_indices = @transform_1, window_bounds = array<i64: 8, 256>}, {transform_indices = @transform_2, window_bounds = array<i64: 8, 128>}]} {
    %c0 = arith.constant 0 : index
    %c0_0 = arith.constant 0 : index
    %0 = vector.load %arg2[%c0, %c0_0] : memref<8x256xf32, #tpu.memory_space<vmem>>, vector<8x256xf32>
    %1 = tpu.iota {dimensions = array<i32: 2>} : vector<8x128x256xi32>
    %2 = vector.shape_cast %0 : vector<8x256xf32> to vector<8x1x256xf32>
    %cst = arith.constant 0.000000e+00 : f32
    %c0_i32 = arith.constant 0 : i32
    %c128_i32 = arith.constant 128 : i32
    %3 = arith.muli %c0_i32, %c128_i32 : i32
    %4 = tpu.assume_multiple %3, 128 : i32
    %c0_1 = arith.constant 0 : index
    %5 = arith.index_cast %4 : i32 to index
    %6 = vector.load %arg1[%c0_1, %5] : memref<8x128xi32, #tpu.memory_space<vmem>>, vector<8x128xi32>
    %7 = vector.shape_cast %6 : vector<8x128xi32> to vector<8x128x1xi32>
    %8 = vector.broadcast %7 : vector<8x128x1xi32> to vector<8x128x256xi32>
    %9 = arith.cmpi eq, %8, %1 : vector<8x128x256xi32>
    %10 = vector.shape_cast %2 : vector<8x1x256xf32> to vector<8x1x256xf32>
    %11 = vector.broadcast %10 : vector<8x1x256xf32> to vector<8x128x256xf32>
    %12 = vector.broadcast %cst : f32 to vector<8x128x256xf32>
    %13 = arith.select %9, %11, %12 : vector<8x128x256xi1>, vector<8x128x256xf32>
    %cst_2 = arith.constant dense<0.000000e+00> : vector<8x128xf32>
    %14 = vector.multi_reduction <add>, %13, %cst_2 [2] : vector<8x128x256xf32> to vector<8x128xf32>
    %c0_3 = arith.constant 0 : index
    %15 = arith.index_cast %4 : i32 to index
    %16 = vector.load %arg3[%c0_3, %15] : memref<8x128xf32, #tpu.memory_space<vmem>>, vector<8x128xf32>
    tpu.vector_store %arg3[%c0_3, %15], %14 {strides = array<i32>} : memref<8x128xf32, #tpu.memory_space<vmem>>, vector<8x128xf32>,
    %c1_i32 = arith.constant 1 : i32
    return
  }
  func.func @transform_0(%arg0: i32) -> (i32, i32) {
    %c0_i32 = arith.constant 0 : i32
    %c0_i32_0 = arith.constant 0 : i32
    return %arg0, %c0_i32 : i32, i32
  }
  func.func @transform_1(%arg0: i32) -> (i32, i32) {
    %c0_i32 = arith.constant 0 : i32
    %c0_i32_0 = arith.constant 0 : i32
    return %arg0, %c0_i32 : i32, i32
  }
  func.func @transform_2(%arg0: i32) -> (i32, i32) {
    %c0_i32 = arith.constant 0 : i32
    %c0_i32_0 = arith.constant 0 : i32
    return %arg0, %c0_i32 : i32, i32
  }
}

</mosaic_0001>

<llo_original>
// kernel: tpu_custom_call.1
$region0: #{tpu_custom_call.1}
  #allocation0 [shape = 'u32[]', space=smem, size = 0x4, offset = 0x4, fixed_abs, tag = 'smem constant byte address 0x4 - core index']
  #allocation1 [shape = 'u32[144,128]{1,0:T(1,128)}', space=vmem, size = 0x12000, scoped, tag = 'internal scratch']
  %s0 = inlined_call_operand.hbm [shape: s32[16,128], index: 0, kind: input, shape index: {}]
  %s1 = inlined_call_operand.hbm [shape: f32[16,256], index: 1, kind: input, shape index: {}]
  %s2 = inlined_call_operand.hbm [shape: f32[16,128], index: 2, kind: output, shape index: {}]
  %s3 = sld [smem:[#allocation0]]
  $region49: #{tpu_custom_call.1} parent=0
    _
  %s5 = ssub.s32 1, %s3
  %s6 = scalar_select 0, %s5, %s3
  $region1: #{tpu_custom_call.1} parent=0
    #allocation2 [shape = 'u8[8192]{0}', space=vmem, size = 0x2000, scoped, tag = 'input window, operand 0']
    #allocation3 [shape = 's32[2]{0}', space=sflag, size = 0x8, scoped, tag = 'scoped memory for tpu_custom_call.1']
    #allocation4 [shape = 's32[2]{0}', space=sflag, size = 0x8, scoped, tag = 'scoped memory for tpu_custom_call.1']
    #allocation5 [shape = 'u8[16384]{0}', space=vmem, size = 0x4000, scoped, tag = 'input window, operand 1']
    #allocation6 [shape = 's32[2]{0}', space=sflag, size = 0x8, scoped, tag = 'scoped memory for tpu_custom_call.1']
    #allocation7 [shape = 'u8[8192]{0}', space=vmem, size = 0x2000, scoped, tag = 'output window, operand 0']
    %7 = vsyncpa [#allocation3], 0
    %s8 = scalar_lea.sflag [#allocation3], 1
    %9 = vsyncpa %s8, 0
    %10 = vsyncpa [#allocation6], 0
    %s11 = scalar_lea.sflag [#allocation6], 1
    %12 = vsyncpa %s11, 0
    %13 = vsyncpa [#allocation4], 0
    %s14 = scalar_lea.sflag [#allocation4], 1
    %15 = vsyncpa %s14, 0
    loop: start=0, step=1, limit=4
    $region2: #{tpu_custom_call.1} parent=1 // loop_pre_header
      _
    $region3: #{tpu_custom_call.1} parent=1 // loop_header
      %s17 = sphi 0, %s21
      %p18 = scmp.ge.s32.totalorder %s17, 4
      %s27 = sphi 0, %s29
      %s30 = sphi 0, %s27
      %s31 = sphi 0, %s30
      %s47 = sphi 0, %s31
      %s53 = sphi 0, %s55
      %s56 = sphi 0, %s53
      %s57 = sphi 0, %s56
      %s73 = sphi 0, %s57
      %s79 = sphi 0, %s81
      %s82 = sphi 0, %s79
      %s83 = sphi 0, %s82
      %s99 = sphi 0, %s83
    $region4: #{tpu_custom_call.1} parent=1 // loop_header_branch
      %20 = sbr.rel (%p18) target = $region8
    $region5: #{tpu_custom_call.1} parent=1 // loop_body
      %s22 = ssub.s32 %s17, 1
      %s23 = ssub.s32 %s17, 2
      %s24 = sadd.s32 %s17, 1
      %s25 = ssub.s32 %s17, %s24
      %p26 = scmp.eq.s32.totalorder %s25, 0
      %s28 = sadd.s32 %s27, 1
      %s29 = scalar_select %p26, %s27, %s28
      %p32 = pneg %p26
      %p33 = scmp.eq.s32.totalorder %s17, 1
      %p34 = por %p32, %p33
      %p35 = scmp.ne.s32.totalorder %s27, %s30
      %p36 = scmp.eq.s32.totalorder %s17, 0
      %p37 = por %p35, %p36
      %p38 = scmp.ne.s32.totalorder %s27, %s30
      %p39 = scmp.eq.s32.totalorder %s22, 1
      %p40 = por %p38, %p39
      %p41 = scmp.ne.s32.totalorder %s30, %s31
      %p42 = scmp.eq.s32.totalorder %s22, 0
      %p43 = por %p41, %p42
      %p44 = scmp.ne.s32.totalorder %s30, %s31
      %p45 = scmp.eq.s32.totalorder %s23, 1
      %p46 = por %p44, %p45
      %p48 = scmp.ne.s32.totalorder %s31, %s47
      %p49 = scmp.eq.s32.totalorder %s23, 0
      %p50 = por %p48, %p49
      %s51 = ssub.s32 %s17, %s24
      %p52 = scmp.eq.s32.totalorder %s51, 0
      %s54 = sadd.s32 %s53, 1
      %s55 = scalar_select %p52, %s53, %s54
      %p58 = pneg %p52
      %p59 = scmp.eq.s32.totalorder %s17, 1
      %p60 = por %p58, %p59
      %p61 = scmp.ne.s32.totalorder %s53, %s56
      %p62 = scmp.eq.s32.totalorder %s17, 0
      %p63 = por %p61, %p62
      %p64 = scmp.ne.s32.totalorder %s53, %s56
      %p65 = scmp.eq.s32.totalorder %s22, 1
      %p66 = por %p64, %p65
      %p67 = scmp.ne.s32.totalorder %s56, %s57
      %p68 = scmp.eq.s32.totalorder %s22, 0
      %p69 = por %p67, %p68
      %p70 = scmp.ne.s32.totalorder %s56, %s57
      %p71 = scmp.eq.s32.totalorder %s23, 1
      %p72 = por %p70, %p71
      %p74 = scmp.ne.s32.totalorder %s57, %s73
      %p75 = scmp.eq.s32.totalorder %s23, 0
      %p76 = por %p74, %p75
      %s77 = ssub.s32 %s17, %s24
      %p78 = scmp.eq.s32.totalorder %s77, 0
      %s80 = sadd.s32 %s79, 1
      %s81 = scalar_select %p78, %s79, %s80
      %p84 = pneg %p78
      %p85 = scmp.eq.s32.totalorder %s17, 1
      %p86 = por %p84, %p85
      %p87 = scmp.ne.s32.totalorder %s79, %s82
      %p88 = scmp.eq.s32.totalorder %s17, 0
      %p89 = por %p87, %p88
      %p90 = scmp.ne.s32.totalorder %s79, %s82
      %p91 = scmp.eq.s32.totalorder %s22, 1
      %p92 = por %p90, %p91
      %p93 = scmp.ne.s32.totalorder %s82, %s83
      %p94 = scmp.eq.s32.totalorder %s22, 0
      %p95 = por %p93, %p94
      %p96 = scmp.ne.s32.totalorder %s82, %s83
      %p97 = scmp.eq.s32.totalorder %s23, 1
      %p98 = por %p96, %p97
      %p100 = scmp.ne.s32.totalorder %s83, %s99
      %p101 = scmp.eq.s32.totalorder %s23, 0
      %p102 = por %p100, %p101
      %p103 = scmp.le.s32.totalorder 1, %s17
      %p104 = scmp.lt.s32.totalorder %s17, 3
      %p105 = pnand %p103, %p104
      %p106 = pneg %p105
      // Predicated region
      $region9: #{tpu_custom_call.1} parent=5 // pred_check
        _
      $region10: #{tpu_custom_call.1} parent=5 // pred_check_branch
        %108 = sbr.rel (%p105) target = $region12
      $region11: #{tpu_custom_call.1} parent=5 // pred_region
        %s109 = ssub.s32 %s17, 1
      $region12: #{tpu_custom_call.1} parent=5 // pred_fallthru
        _
      %p110 = scmp.lt.s32.totalorder %s17, 2
      // Predicated region
      $region13: #{tpu_custom_call.1} parent=5 // pred_check
        %p111 = pneg %p110
      $region14: #{tpu_custom_call.1} parent=5 // pred_check_branch
        %113 = sbr.rel (%p111) target = $region16
      $region15: #{tpu_custom_call.1} parent=5 // pred_region
        // Predicated region
        $region17: #{tpu_custom_call.1} parent=15 // pred_check
          %p114 = pneg %p37
        $region18: #{tpu_custom_call.1} parent=15 // pred_check_branch
          %116 = sbr.rel (%p114) target = $region20
        $region19: #{tpu_custom_call.1} parent=15 // pred_region
          %s117 = sand.u32 %s27, 1
          %s118 = scalar_lea.sflag [#allocation3], %s117
          %s119 = sand.u32 %s27, 1
          %s120 = smul.addr %s119, 8
          %s121 = scalar_lea.vmem [#allocation2], %s120
          %s123 = ssub.s32 128, 128
          %124 = vsyncadd %s118, %s123
          %s125 = smul.addr %s17, 128
          %s126 = scalar_lea.hbm %s0, %s125
          %s128 = sshll.u32 %s121, 4
          %s129 = int_to_ptr.vmem [resolvable:$true] %s128
          %131 = dma.hbm_to_vmem [thread:$0]  %s126, 128, %s129, %s118
        $region20: #{tpu_custom_call.1} parent=15 // pred_fallthru
          _
        // Predicated region
        $region21: #{tpu_custom_call.1} parent=15 // pred_check
          %p132 = pneg %p63
        $region22: #{tpu_custom_call.1} parent=15 // pred_check_branch
          %134 = sbr.rel (%p132) target = $region24
        $region23: #{tpu_custom_call.1} parent=15 // pred_region
          %s135 = sand.u32 %s53, 1
          %s136 = scalar_lea.sflag [#allocation6], %s135
          %s137 = sand.u32 %s53, 1
          %s138 = smul.addr %s137, 16
          %s139 = scalar_lea.vmem [#allocation5], %s138
          %s141 = ssub.s32 256, 256
          %142 = vsyncadd %s136, %s141
          %s143 = smul.addr %s17, 2
          %s144 = smul.addr %s143, 128
          %s145 = scalar_lea.hbm %s1, %s144
          %s147 = sshll.u32 %s139, 4
          %s148 = int_to_ptr.vmem [resolvable:$true] %s147
          %150 = dma.hbm_to_vmem [thread:$0]  %s145, 256, %s148, %s136
        $region24: #{tpu_custom_call.1} parent=15 // pred_fallthru
          _
      $region16: #{tpu_custom_call.1} parent=5 // pred_fallthru
        _
      %p151 = scmp.le.s32.totalorder 1, %s17
      %p152 = scmp.lt.s32.totalorder %s17, 3
      %p153 = pnand %p151, %p152
      %p154 = pneg %p153
      // Predicated region
      $region25: #{tpu_custom_call.1} parent=5 // pred_check
        _
      $region26: #{tpu_custom_call.1} parent=5 // pred_check_branch
        %156 = sbr.rel (%p153) target = $region28
      $region27: #{tpu_custom_call.1} parent=5 // pred_region
        %s157 = ssub.s32 %s17, 1
        %s158 = sand.u32 %s30, 1
        %s159 = scalar_lea.sflag [#allocation3], %s158
        %s160 = sand.u32 %s30, 1
        %s161 = smul.addr %s160, 8
        %s162 = scalar_lea.vmem [#allocation2], %s161
        // Predicated region
        $region29: #{tpu_custom_call.1} parent=27 // pred_check
          %p163 = pneg %p43
        $region30: #{tpu_custom_call.1} parent=27 // pred_check_branch
          %165 = sbr.rel (%p163) target = $region32
        $region31: #{tpu_custom_call.1} parent=27 // pred_region
          %166 = dma.done %s159, 128
        $region32: #{tpu_custom_call.1} parent=27 // pred_fallthru
          _
        %s167 = sand.u32 %s56, 1
        %s168 = scalar_lea.sflag [#allocation6], %s167
        %s169 = sand.u32 %s56, 1
        %s170 = smul.addr %s169, 16
        %s171 = scalar_lea.vmem [#allocation5], %s170
        // Predicated region
        $region33: #{tpu_custom_call.1} parent=27 // pred_check
          %p172 = pneg %p69
        $region34: #{tpu_custom_call.1} parent=27 // pred_check_branch
          %174 = sbr.rel (%p172) target = $region36
        $region35: #{tpu_custom_call.1} parent=27 // pred_region
          %175 = dma.done %s168, 256
        $region36: #{tpu_custom_call.1} parent=27 // pred_fallthru
          _
        %s176 = sand.u32 %s30, 1
        %s177 = scalar_lea.sflag [#allocation3], %s176
        %s178 = sand.u32 %s30, 1
        %s179 = smul.addr %s178, 8
        %s180 = scalar_lea.vmem [#allocation2], %s179
        %p181 = pneg %p43
        %p182 = pneg %p40
        %s183 = sand.u32 %s56, 1
        %s184 = scalar_lea.sflag [#allocation6], %s183
        %s185 = sand.u32 %s56, 1
        %s186 = smul.addr %s185, 16
        %s187 = scalar_lea.vmem [#allocation5], %s186
        %p188 = pneg %p69
        %p189 = pneg %p66
        %p190 = pneg %p95
        %p191 = pneg %p92
        %s192 = sand.u32 %s82, 1
        %s193 = scalar_lea.sflag [#allocation4], %s192
        %s194 = sand.u32 %s82, 1
        %s195 = smul.addr %s194, 8
        %s196 = scalar_lea.vmem [#allocation7], %s195
        %v197 = vld [vmem:[%s171] sm:$0xff]
        %v198 = vld [vmem:[%s171 + $0x8] sm:$0xff]
        %v199 = vlaneseq
        %v200 = vand.u32 %v199, 127
        %v201 = vadd.s32 %v200, 128
        %v204 = vcombine.low %v197, %v198
        %v205 = vcombine.high %v197, %v198
        %v207 = vunpack.c.l.s4 1966171168
        %v208 = vunpack.c.0.s8 %v207
        %v209 = vlaneseq
        %v210 = vshrl.u32 %v209, 7
        %v211 = vsub.s32 %v208, %v210
        %v212 = vrot.slane %v204, %v211
        %v214 = vunpack.c.l.s4 1966171168
        %v215 = vunpack.c.0.s8 %v214
        %v216 = vlaneseq
        %v217 = vshrl.u32 %v216, 7
        %v218 = vsub.s32 %v215, %v217
        %v219 = vrot.slane %v205, %v218
        %v220 = vcombine.high %v212, %v212
        %v221 = vcombine.high %v219, %v219
        %v223 = vunpack.c.l.s4 1966171168
        %v224 = vunpack.c.0.s8 %v223
        %v225 = vlaneseq
        %v226 = vshrl.u32 %v225, 7
        %v227 = vsub.s32 %v224, %v226
        %v228 = vrot.slane %v212, %v227
        %v230 = vunpack.c.l.s4 1966171168
        %v231 = vunpack.c.0.s8 %v230
        %v232 = vlaneseq
        %v233 = vshrl.u32 %v232, 7
        %v234 = vsub.s32 %v231, %v233
        %v235 = vrot.slane %v219, %v234
        %v237 = vunpack.c.l.s4 1966171168
        %v238 = vunpack.c.0.s8 %v237
        %v239 = vlaneseq
        %v240 = vshrl.u32 %v239, 7
        %v241 = vsub.s32 %v238, %v240
        %v242 = vrot.slane %v220, %v241
        %v244 = vunpack.c.l.s4 1966171168
        %v245 = vunpack.c.0.s8 %v244
        %v246 = vlaneseq
        %v247 = vshrl.u32 %v246, 7
        %v248 = vsub.s32 %v245, %v247
        %v249 = vrot.slane %v221, %v248
        %v250 = vcombine.high %v228, %v228
        %v251 = vcombine.high %v235, %v235
        %v252 = vcombine.high %v242, %v242
        %v253 = vcombine.high %v249, %v249
        %v254 = vld [vmem:[%s162] sm:$0xff]
        %v255 = vlaneseq
        %v256 = vshrl.u32 %v255, 7
        %v257 = vsub.s32 0, %v256
        %v258 = vrot.slane %v254, %v257
        %260 = vbcast.lane.b32.xlu0 %v258, 256
        %v261 = vpop.permute.xlu0 %260
        %s263 = sor.u32 256, 8
        %264 = vbcast.lane.b32.xlu0 %v258, %s263
        %v265 = vpop.permute.xlu0 %264
        %s267 = sor.u32 256, 16
        %268 = vbcast.lane.b32.xlu0 %v258, %s267
        %v269 = vpop.permute.xlu0 %268
        %s271 = sor.u32 256, 24
        %272 = vbcast.lane.b32.xlu0 %v258, %s271
        %v273 = vpop.permute.xlu0 %272
        %s275 = sor.u32 256, 32
        %276 = vbcast.lane.b32.xlu0 %v258, %s275
        %v277 = vpop.permute.xlu0 %276
        %s279 = sor.u32 256, 40
        %280 = vbcast.lane.b32.xlu0 %v258, %s279
        %v281 = vpop.permute.xlu0 %280
        %s283 = sor.u32 256, 48
        %284 = vbcast.lane.b32.xlu0 %v258, %s283
        %v285 = vpop.permute.xlu0 %284
        %s287 = sor.u32 256, 56
        %288 = vbcast.lane.b32.xlu0 %v258, %s287
        %v289 = vpop.permute.xlu0 %288
        %s291 = sor.u32 256, 64
        %292 = vbcast.lane.b32.xlu0 %v258, %s291
        %v293 = vpop.permute.xlu0 %292
        %s295 = sor.u32 256, 72
        %296 = vbcast.lane.b32.xlu0 %v258, %s295
        %v297 = vpop.permute.xlu0 %296
        %s299 = sor.u32 256, 80
        %300 = vbcast.lane.b32.xlu0 %v258, %s299
        %v301 = vpop.permute.xlu0 %300
        %s303 = sor.u32 256, 88
        %304 = vbcast.lane.b32.xlu0 %v258, %s303
        %v305 = vpop.permute.xlu0 %304
        %s307 = sor.u32 256, 96
        %308 = vbcast.lane.b32.xlu0 %v258, %s307
        %v309 = vpop.permute.xlu0 %308
        %s311 = sor.u32 256, 104
        %312 = vbcast.lane.b32.xlu0 %v258, %s311
        %v313 = vpop.permute.xlu0 %312
        %s315 = sor.u32 256, 112
        %316 = vbcast.lane.b32.xlu0 %v258, %s315
        %v317 = vpop.permute.xlu0 %316
        %s319 = sor.u32 256, 120
        %320 = vbcast.lane.b32.xlu0 %v258, %s319
        %v321 = vpop.permute.xlu0 %320
        %v322 = vlaneseq
        %v323 = vshrl.u32 %v322, 7
        %v324 = vsub.s32 1, %v323
        %v325 = vrot.slane %v254, %v324
        %327 = vbcast.lane.b32.xlu0 %v325, 256
        %v328 = vpop.permute.xlu0 %327
        %s330 = sor.u32 256, 8
        %331 = vbcast.lane.b32.xlu0 %v325, %s330
        %v332 = vpop.permute.xlu0 %331
        %s334 = sor.u32 256, 16
        %335 = vbcast.lane.b32.xlu0 %v325, %s334
        %v336 = vpop.permute.xlu0 %335
        %s338 = sor.u32 256, 24
        %339 = vbcast.lane.b32.xlu0 %v325, %s338
        %v340 = vpop.permute.xlu0 %339
        %s342 = sor.u32 256, 32
        %343 = vbcast.lane.b32.xlu0 %v325, %s342
        %v344 = vpop.permute.xlu0 %343
        %s346 = sor.u32 256, 40
        %347 = vbcast.lane.b32.xlu0 %v325, %s346
        %v348 = vpop.permute.xlu0 %347
        %s350 = sor.u32 256, 48
        %351 = vbcast.lane.b32.xlu0 %v325, %s350
        %v352 = vpop.permute.xlu0 %351
        %s354 = sor.u32 256, 56
        %355 = vbcast.lane.b32.xlu0 %v325, %s354
        %v356 = vpop.permute.xlu0 %355
        %s358 = sor.u32 256, 64
        %359 = vbcast.lane.b32.xlu0 %v325, %s358
        %v360 = vpop.permute.xlu0 %359
        %s362 = sor.u32 256, 72
        %363 = vbcast.lane.b32.xlu0 %v325, %s362
        %v364 = vpop.permute.xlu0 %363
        %s366 = sor.u32 256, 80
        %367 = vbcast.lane.b32.xlu0 %v325, %s366
        %v368 = vpop.permute.xlu0 %367
        %s370 = sor.u32 256, 88
        %371 = vbcast.lane.b32.xlu0 %v325, %s370
        %v372 = vpop.permute.xlu0 %371
        %s374 = sor.u32 256, 96
        %375 = vbcast.lane.b32.xlu0 %v325, %s374
        %v376 = vpop.permute.xlu0 %375
        %s378 = sor.u32 256, 104
        %379 = vbcast.lane.b32.xlu0 %v325, %s378
        %v380 = vpop.permute.xlu0 %379
        %s382 = sor.u32 256, 112
        %383 = vbcast.lane.b32.xlu0 %v325, %s382
        %v384 = vpop.permute.xlu0 %383
        %s386 = sor.u32 256, 120
        %387 = vbcast.lane.b32.xlu0 %v325, %s386
        %v388 = vpop.permute.xlu0 %387
        %v389 = vlaneseq
        %v390 = vshrl.u32 %v389, 7
        %v391 = vsub.s32 2, %v390
        %v392 = vrot.slane %v254, %v391
        %394 = vbcast.lane.b32.xlu0 %v392, 256
        %v395 = vpop.permute.xlu0 %394
        %s397 = sor.u32 256, 8
        %398 = vbcast.lane.b32.xlu0 %v392, %s397
        %v399 = vpop.permute.xlu0 %398
        %s401 = sor.u32 256, 16
        %402 = vbcast.lane.b32.xlu0 %v392, %s401
        %v403 = vpop.permute.xlu0 %402
        %s405 = sor.u32 256, 24
        %406 = vbcast.lane.b32.xlu0 %v392, %s405
        %v407 = vpop.permute.xlu0 %406
        %s409 = sor.u32 256, 32
        %410 = vbcast.lane.b32.xlu0 %v392, %s409
        %v411 = vpop.permute.xlu0 %410
        %s413 = sor.u32 256, 40
        %414 = vbcast.lane.b32.xlu0 %v392, %s413
        %v415 = vpop.permute.xlu0 %414
        %s417 = sor.u32 256, 48
        %418 = vbcast.lane.b32.xlu0 %v392, %s417
        %v419 = vpop.permute.xlu0 %418
        %s421 = sor.u32 256, 56
        %422 = vbcast.lane.b32.xlu0 %v392, %s421
        %v423 = vpop.permute.xlu0 %422
        %s425 = sor.u32 256, 64
        %426 = vbcast.lane.b32.xlu0 %v392, %s425
        %v427 = vpop.permute.xlu0 %426
        %s429 = sor.u32 256, 72
        %430 = vbcast.lane.b32.xlu0 %v392, %s429
        %v431 = vpop.permute.xlu0 %430
        %s433 = sor.u32 256, 80
        %434 = vbcast.lane.b32.xlu0 %v392, %s433
        %v435 = vpop.permute.xlu0 %434
        %s437 = sor.u32 256, 88
        %438 = vbcast.lane.b32.xlu0 %v392, %s437
        %v439 = vpop.permute.xlu0 %438
        %s441 = sor.u32 256, 96
        %442 = vbcast.lane.b32.xlu0 %v392, %s441
        %v443 = vpop.permute.xlu0 %442
        %s445 = sor.u32 256, 104
        %446 = vbcast.lane.b32.xlu0 %v392, %s445
        %v447 = vpop.permute.xlu0 %446
        %s449 = sor.u32 256, 112
        %450 = vbcast.lane.b32.xlu0 %v392, %s449
        %v451 = vpop.permute.xlu0 %450
        %s453 = sor.u32 256, 120
        %454 = vbcast.lane.b32.xlu0 %v392, %s453
        %v455 = vpop.permute.xlu0 %454
        %v456 = vlaneseq
        %v457 = vshrl.u32 %v456, 7
        %v458 = vsub.s32 3, %v457
        %v459 = vrot.slane %v254, %v458
        %461 = vbcast.lane.b32.xlu0 %v459, 256
        %v462 = vpop.permute.xlu0 %461
        %s464 = sor.u32 256, 8
        %465 = vbcast.lane.b32.xlu0 %v459, %s464
        %v466 = vpop.permute.xlu0 %465
        %s468 = sor.u32 256, 16
        %469 = vbcast.lane.b32.xlu0 %v459, %s468
        %v470 = vpop.permute.xlu0 %469
        %s472 = sor.u32 256, 24
        %473 = vbcast.lane.b32.xlu0 %v459, %s472
        %v474 = vpop.permute.xlu0 %473
        %s476 = sor.u32 256, 32
        %477 = vbcast.lane.b32.xlu0 %v459, %s476
        %v478 = vpop.permute.xlu0 %477
        %s480 = sor.u32 256, 40
        %481 = vbcast.lane.b32.xlu0 %v459, %s480
        %v482 = vpop.permute.xlu0 %481
        %s484 = sor.u32 256, 48
        %485 = vbcast.lane.b32.xlu0 %v459, %s484
        %v486 = vpop.permute.xlu0 %485
        %s488 = sor.u32 256, 56
        %489 = vbcast.lane.b32.xlu0 %v459, %s488
        %v490 = vpop.permute.xlu0 %489
        %s492 = sor.u32 256, 64
        %493 = vbcast.lane.b32.xlu0 %v459, %s492
        %v494 = vpop.permute.xlu0 %493
        %s496 = sor.u32 256, 72
        %497 = vbcast.lane.b32.xlu0 %v459, %s496
        %v498 = vpop.permute.xlu0 %497
        %s500 = sor.u32 256, 80
        %501 = vbcast.lane.b32.xlu0 %v459, %s500
        %v502 = vpop.permute.xlu0 %501
        %s504 = sor.u32 256, 88
        %505 = vbcast.lane.b32.xlu0 %v459, %s504
        %v506 = vpop.permute.xlu0 %505
        %s508 = sor.u32 256, 96
        %509 = vbcast.lane.b32.xlu0 %v459, %s508
        %v510 = vpop.permute.xlu0 %509
        %s512 = sor.u32 256, 104
        %513 = vbcast.lane.b32.xlu0 %v459, %s512
        %v514 = vpop.permute.xlu0 %513
        %s516 = sor.u32 256, 112
        %517 = vbcast.lane.b32.xlu0 %v459, %s516
        %v518 = vpop.permute.xlu0 %517
        %s520 = sor.u32 256, 120
        %521 = vbcast.lane.b32.xlu0 %v459, %s520
        %v522 = vpop.permute.xlu0 %521
        %v523 = vlaneseq
        %v524 = vshrl.u32 %v523, 7
        %v525 = vsub.s32 4, %v524
        %v526 = vrot.slane %v254, %v525
        %528 = vbcast.lane.b32.xlu0 %v526, 256
        %v529 = vpop.permute.xlu0 %528
        %s531 = sor.u32 256, 8
        %532 = vbcast.lane.b32.xlu0 %v526, %s531
        %v533 = vpop.permute.xlu0 %532
        %s535 = sor.u32 256, 16
        %536 = vbcast.lane.b32.xlu0 %v526, %s535
        %v537 = vpop.permute.xlu0 %536
        %s539 = sor.u32 256, 24
        %540 = vbcast.lane.b32.xlu0 %v526, %s539
        %v541 = vpop.permute.xlu0 %540
        %s543 = sor.u32 256, 32
        %544 = vbcast.lane.b32.xlu0 %v526, %s543
        %v545 = vpop.permute.xlu0 %544
        %s547 = sor.u32 256, 40
        %548 = vbcast.lane.b32.xlu0 %v526, %s547
        %v549 = vpop.permute.xlu0 %548
        %s551 = sor.u32 256, 48
        %552 = vbcast.lane.b32.xlu0 %v526, %s551
        %v553 = vpop.permute.xlu0 %552
        %s555 = sor.u32 256, 56
        %556 = vbcast.lane.b32.xlu0 %v526, %s555
        %v557 = vpop.permute.xlu0 %556
        %s559 = sor.u32 256, 64
        %560 = vbcast.lane.b32.xlu0 %v526, %s559
        %v561 = vpop.permute.xlu0 %560
        %s563 = sor.u32 256, 72
        %564 = vbcast.lane.b32.xlu0 %v526, %s563
        %v565 = vpop.permute.xlu0 %564
        %s567 = sor.u32 256, 80
        %568 = vbcast.lane.b32.xlu0 %v526, %s567
        %v569 = vpop.permute.xlu0 %568
        %s571 = sor.u32 256, 88
        %572 = vbcast.lane.b32.xlu0 %v526, %s571
        %v573 = vpop.permute.xlu0 %572
        %s575 = sor.u32 256, 96
        %576 = vbcast.lane.b32.xlu0 %v526, %s575
        %v577 = vpop.permute.xlu0 %576
        %s579 = sor.u32 256, 104
        %580 = vbcast.lane.b32.xlu0 %v526, %s579
        %v581 = vpop.permute.xlu0 %580
        %s583 = sor.u32 256, 112
        %584 = vbcast.lane.b32.xlu0 %v526, %s583
        %v585 = vpop.permute.xlu0 %584
        %s587 = sor.u32 256, 120
        %588 = vbcast.lane.b32.xlu0 %v526, %s587
        %v589 = vpop.permute.xlu0 %588
        %v590 = vlaneseq
        %v591 = vshrl.u32 %v590, 7
        %v592 = vsub.s32 5, %v591
        %v593 = vrot.slane %v254, %v592
        %595 = vbcast.lane.b32.xlu0 %v593, 256
        %v596 = vpop.permute.xlu0 %595
        %s598 = sor.u32 256, 8
        %599 = vbcast.lane.b32.xlu0 %v593, %s598
        %v600 = vpop.permute.xlu0 %599
        %s602 = sor.u32 256, 16
        %603 = vbcast.lane.b32.xlu0 %v593, %s602
        %v604 = vpop.permute.xlu0 %603
        %s606 = sor.u32 256, 24
        %607 = vbcast.lane.b32.xlu0 %v593, %s606
        %v608 = vpop.permute.xlu0 %607
        %s610 = sor.u32 256, 32
        %611 = vbcast.lane.b32.xlu0 %v593, %s610
        %v612 = vpop.permute.xlu0 %611
        %s614 = sor.u32 256, 40
        %615 = vbcast.lane.b32.xlu0 %v593, %s614
        %v616 = vpop.permute.xlu0 %615
        %s618 = sor.u32 256, 48
        %619 = vbcast.lane.b32.xlu0 %v593, %s618
        %v620 = vpop.permute.xlu0 %619
        %s622 = sor.u32 256, 56
        %623 = vbcast.lane.b32.xlu0 %v593, %s622
        %v624 = vpop.permute.xlu0 %623
        %s626 = sor.u32 256, 64
        %627 = vbcast.lane.b32.xlu0 %v593, %s626
        %v628 = vpop.permute.xlu0 %627
        %s630 = sor.u32 256, 72
        %631 = vbcast.lane.b32.xlu0 %v593, %s630
        %v632 = vpop.permute.xlu0 %631
        %s634 = sor.u32 256, 80
        %635 = vbcast.lane.b32.xlu0 %v593, %s634
        %v636 = vpop.permute.xlu0 %635
        %s638 = sor.u32 256, 88
        %639 = vbcast.lane.b32.xlu0 %v593, %s638
        %v640 = vpop.permute.xlu0 %639
        %s642 = sor.u32 256, 96
        %643 = vbcast.lane.b32.xlu0 %v593, %s642
        %v644 = vpop.permute.xlu0 %643
        %s646 = sor.u32 256, 104
        %647 = vbcast.lane.b32.xlu0 %v593, %s646
        %v648 = vpop.permute.xlu0 %647
        %s650 = sor.u32 256, 112
        %651 = vbcast.lane.b32.xlu0 %v593, %s650
        %v652 = vpop.permute.xlu0 %651
        %s654 = sor.u32 256, 120
        %655 = vbcast.lane.b32.xlu0 %v593, %s654
        %v656 = vpop.permute.xlu0 %655
        %v657 = vlaneseq
        %v658 = vshrl.u32 %v657, 7
        %v659 = vsub.s32 6, %v658
        %v660 = vrot.slane %v254, %v659
        %662 = vbcast.lane.b32.xlu0 %v660, 256
        %v663 = vpop.permute.xlu0 %662
        %s665 = sor.u32 256, 8
        %666 = vbcast.lane.b32.xlu0 %v660, %s665
        %v667 = vpop.permute.xlu0 %666
        %s669 = sor.u32 256, 16
        %670 = vbcast.lane.b32.xlu0 %v660, %s669
        %v671 = vpop.permute.xlu0 %670
        %s673 = sor.u32 256, 24
        %674 = vbcast.lane.b32.xlu0 %v660, %s673
        %v675 = vpop.permute.xlu0 %674
        %s677 = sor.u32 256, 32
        %678 = vbcast.lane.b32.xlu0 %v660, %s677
        %v679 = vpop.permute.xlu0 %678
        %s681 = sor.u32 256, 40
        %682 = vbcast.lane.b32.xlu0 %v660, %s681
        %v683 = vpop.permute.xlu0 %682
        %s685 = sor.u32 256, 48
        %686 = vbcast.lane.b32.xlu0 %v660, %s685
        %v687 = vpop.permute.xlu0 %686
        %s689 = sor.u32 256, 56
        %690 = vbcast.lane.b32.xlu0 %v660, %s689
        %v691 = vpop.permute.xlu0 %690
        %s693 = sor.u32 256, 64
        %694 = vbcast.lane.b32.xlu0 %v660, %s693
        %v695 = vpop.permute.xlu0 %694
        %s697 = sor.u32 256, 72
        %698 = vbcast.lane.b32.xlu0 %v660, %s697
        %v699 = vpop.permute.xlu0 %698
        %s701 = sor.u32 256, 80
        %702 = vbcast.lane.b32.xlu0 %v660, %s701
        %v703 = vpop.permute.xlu0 %702
        %s705 = sor.u32 256, 88
        %706 = vbcast.lane.b32.xlu0 %v660, %s705
        %v707 = vpop.permute.xlu0 %706
        %s709 = sor.u32 256, 96
        %710 = vbcast.lane.b32.xlu0 %v660, %s709
        %v711 = vpop.permute.xlu0 %710
        %s713 = sor.u32 256, 104
        %714 = vbcast.lane.b32.xlu0 %v660, %s713
        %v715 = vpop.permute.xlu0 %714
        %s717 = sor.u32 256, 112
        %718 = vbcast.lane.b32.xlu0 %v660, %s717
        %v719 = vpop.permute.xlu0 %718
        %s721 = sor.u32 256, 120
        %722 = vbcast.lane.b32.xlu0 %v660, %s721
        %v723 = vpop.permute.xlu0 %722
        %v724 = vlaneseq
        %v725 = vshrl.u32 %v724, 7
        %v726 = vsub.s32 7, %v725
        %v727 = vrot.slane %v254, %v726
        %729 = vbcast.lane.b32.xlu0 %v727, 256
        %v730 = vpop.permute.xlu0 %729
        %s732 = sor.u32 256, 8
        %733 = vbcast.lane.b32.xlu0 %v727, %s732
        %v734 = vpop.permute.xlu0 %733
        %s736 = sor.u32 256, 16
        %737 = vbcast.lane.b32.xlu0 %v727, %s736
        %v738 = vpop.permute.xlu0 %737
        %s740 = sor.u32 256, 24
        %741 = vbcast.lane.b32.xlu0 %v727, %s740
        %v742 = vpop.permute.xlu0 %741
        %s744 = sor.u32 256, 32
        %745 = vbcast.lane.b32.xlu0 %v727, %s744
        %v746 = vpop.permute.xlu0 %745
        %s748 = sor.u32 256, 40
        %749 = vbcast.lane.b32.xlu0 %v727, %s748
        %v750 = vpop.permute.xlu0 %749
        %s752 = sor.u32 256, 48
        %753 = vbcast.lane.b32.xlu0 %v727, %s752
        %v754 = vpop.permute.xlu0 %753
        %s756 = sor.u32 256, 56
        %757 = vbcast.lane.b32.xlu0 %v727, %s756
        %v758 = vpop.permute.xlu0 %757
        %s760 = sor.u32 256, 64
        %761 = vbcast.lane.b32.xlu0 %v727, %s760
        %v762 = vpop.permute.xlu0 %761
        %s764 = sor.u32 256, 72
        %765 = vbcast.lane.b32.xlu0 %v727, %s764
        %v766 = vpop.permute.xlu0 %765
        %s768 = sor.u32 256, 80
        %769 = vbcast.lane.b32.xlu0 %v727, %s768
        %v770 = vpop.permute.xlu0 %769
        %s772 = sor.u32 256, 88
        %773 = vbcast.lane.b32.xlu0 %v727, %s772
        %v774 = vpop.permute.xlu0 %773
        %s776 = sor.u32 256, 96
        %777 = vbcast.lane.b32.xlu0 %v727, %s776
        %v778 = vpop.permute.xlu0 %777
        %s780 = sor.u32 256, 104
        %781 = vbcast.lane.b32.xlu0 %v727, %s780
        %v782 = vpop.permute.xlu0 %781
        %s784 = sor.u32 256, 112
        %785 = vbcast.lane.b32.xlu0 %v727, %s784
        %v786 = vpop.permute.xlu0 %785
        %s788 = sor.u32 256, 120
        %789 = vbcast.lane.b32.xlu0 %v727, %s788
        %v790 = vpop.permute.xlu0 %789
        %vm791 = vcmp.eq.s32.totalorder %v261, %v200
        %vm792 = vcmp.eq.s32.totalorder %v261, %v201
        %vm793 = vcmp.eq.s32.totalorder %v265, %v200
        %vm794 = vcmp.eq.s32.totalorder %v265, %v201
        %vm795 = vcmp.eq.s32.totalorder %v269, %v200
        %vm796 = vcmp.eq.s32.totalorder %v269, %v201
        %vm797 = vcmp.eq.s32.totalorder %v273, %v200
        %vm798 = vcmp.eq.s32.totalorder %v273, %v201
        %vm799 = vcmp.eq.s32.totalorder %v277, %v200
        %vm800 = vcmp.eq.s32.totalorder %v277, %v201
        %vm801 = vcmp.eq.s32.totalorder %v281, %v200
        %vm802 = vcmp.eq.s32.totalorder %v281, %v201
        %vm803 = vcmp.eq.s32.totalorder %v285, %v200
        %vm804 = vcmp.eq.s32.totalorder %v285, %v201
        %vm805 = vcmp.eq.s32.totalorder %v289, %v200
        %vm806 = vcmp.eq.s32.totalorder %v289, %v201
        %vm807 = vcmp.eq.s32.totalorder %v293, %v200
        %vm808 = vcmp.eq.s32.totalorder %v293, %v201
        %vm809 = vcmp.eq.s32.totalorder %v297, %v200
        %vm810 = vcmp.eq.s32.totalorder %v297, %v201
        %vm811 = vcmp.eq.s32.totalorder %v301, %v200
        %vm812 = vcmp.eq.s32.totalorder %v301, %v201
        %vm813 = vcmp.eq.s32.totalorder %v305, %v200
        %vm814 = vcmp.eq.s32.totalorder %v305, %v201
        %vm815 = vcmp.eq.s32.totalorder %v309, %v200
        %vm816 = vcmp.eq.s32.totalorder %v309, %v201
        %vm817 = vcmp.eq.s32.totalorder %v313, %v200
        %vm818 = vcmp.eq.s32.totalorder %v313, %v201
        %vm819 = vcmp.eq.s32.totalorder %v317, %v200
        %vm820 = vcmp.eq.s32.totalorder %v317, %v201
        %vm821 = vcmp.eq.s32.totalorder %v321, %v200
        %vm822 = vcmp.eq.s32.totalorder %v321, %v201
        %vm823 = vcmp.eq.s32.totalorder %v328, %v200
        %vm824 = vcmp.eq.s32.totalorder %v328, %v201
        %vm825 = vcmp.eq.s32.totalorder %v332, %v200
        %vm826 = vcmp.eq.s32.totalorder %v332, %v201
        %vm827 = vcmp.eq.s32.totalorder %v336, %v200
        %vm828 = vcmp.eq.s32.totalorder %v336, %v201
        %vm829 = vcmp.eq.s32.totalorder %v340, %v200
        %vm830 = vcmp.eq.s32.totalorder %v340, %v201
        %vm831 = vcmp.eq.s32.totalorder %v344, %v200
        %vm832 = vcmp.eq.s32.totalorder %v344, %v201
        %vm833 = vcmp.eq.s32.totalorder %v348, %v200
        %vm834 = vcmp.eq.s32.totalorder %v348, %v201
        %vm835 = vcmp.eq.s32.totalorder %v352, %v200
        %vm836 = vcmp.eq.s32.totalorder %v352, %v201
        %vm837 = vcmp.eq.s32.totalorder %v356, %v200
        %vm838 = vcmp.eq.s32.totalorder %v356, %v201
        %vm839 = vcmp.eq.s32.totalorder %v360, %v200
        %vm840 = vcmp.eq.s32.totalorder %v360, %v201
        %vm841 = vcmp.eq.s32.totalorder %v364, %v200
        %vm842 = vcmp.eq.s32.totalorder %v364, %v201
        %vm843 = vcmp.eq.s32.totalorder %v368, %v200
        %vm844 = vcmp.eq.s32.totalorder %v368, %v201
        %vm845 = vcmp.eq.s32.totalorder %v372, %v200
        %vm846 = vcmp.eq.s32.totalorder %v372, %v201
        %vm847 = vcmp.eq.s32.totalorder %v376, %v200
        %vm848 = vcmp.eq.s32.totalorder %v376, %v201
        %vm849 = vcmp.eq.s32.totalorder %v380, %v200
        %vm850 = vcmp.eq.s32.totalorder %v380, %v201
        %vm851 = vcmp.eq.s32.totalorder %v384, %v200
        %vm852 = vcmp.eq.s32.totalorder %v384, %v201
        %vm853 = vcmp.eq.s32.totalorder %v388, %v200
        %vm854 = vcmp.eq.s32.totalorder %v388, %v201
        %vm855 = vcmp.eq.s32.totalorder %v395, %v200
        %vm856 = vcmp.eq.s32.totalorder %v395, %v201
        %vm857 = vcmp.eq.s32.totalorder %v399, %v200
        %vm858 = vcmp.eq.s32.totalorder %v399, %v201
        %vm859 = vcmp.eq.s32.totalorder %v403, %v200
        %vm860 = vcmp.eq.s32.totalorder %v403, %v201
        %vm861 = vcmp.eq.s32.totalorder %v407, %v200
        %vm862 = vcmp.eq.s32.totalorder %v407, %v201
        %vm863 = vcmp.eq.s32.totalorder %v411, %v200
        %vm864 = vcmp.eq.s32.totalorder %v411, %v201
        %vm865 = vcmp.eq.s32.totalorder %v415, %v200
        %vm866 = vcmp.eq.s32.totalorder %v415, %v201
        %vm867 = vcmp.eq.s32.totalorder %v419, %v200
        %vm868 = vcmp.eq.s32.totalorder %v419, %v201
        %vm869 = vcmp.eq.s32.totalorder %v423, %v200
        %vm870 = vcmp.eq.s32.totalorder %v423, %v201
        %vm871 = vcmp.eq.s32.totalorder %v427, %v200
        %vm872 = vcmp.eq.s32.totalorder %v427, %v201
        %vm873 = vcmp.eq.s32.totalorder %v431, %v200
        %vm874 = vcmp.eq.s32.totalorder %v431, %v201
        %vm875 = vcmp.eq.s32.totalorder %v435, %v200
        %vm876 = vcmp.eq.s32.totalorder %v435, %v201
        %vm877 = vcmp.eq.s32.totalorder %v439, %v200
        %vm878 = vcmp.eq.s32.totalorder %v439, %v201
        %vm879 = vcmp.eq.s32.totalorder %v443, %v200
        %vm880 = vcmp.eq.s32.totalorder %v443, %v201
        %vm881 = vcmp.eq.s32.totalorder %v447, %v200
        %vm882 = vcmp.eq.s32.totalorder %v447, %v201
        %vm883 = vcmp.eq.s32.totalorder %v451, %v200
        %vm884 = vcmp.eq.s32.totalorder %v451, %v201
        %vm885 = vcmp.eq.s32.totalorder %v455, %v200
        %vm886 = vcmp.eq.s32.totalorder %v455, %v201
        %vm887 = vcmp.eq.s32.totalorder %v462, %v200
        %vm888 = vcmp.eq.s32.totalorder %v462, %v201
        %vm889 = vcmp.eq.s32.totalorder %v466, %v200
        %vm890 = vcmp.eq.s32.totalorder %v466, %v201
        %vm891 = vcmp.eq.s32.totalorder %v470, %v200
        %vm892 = vcmp.eq.s32.totalorder %v470, %v201
        %vm893 = vcmp.eq.s32.totalorder %v474, %v200
        %vm894 = vcmp.eq.s32.totalorder %v474, %v201
        %vm895 = vcmp.eq.s32.totalorder %v478, %v200
        %vm896 = vcmp.eq.s32.totalorder %v478, %v201
        %vm897 = vcmp.eq.s32.totalorder %v482, %v200
        %vm898 = vcmp.eq.s32.totalorder %v482, %v201
        %vm899 = vcmp.eq.s32.totalorder %v486, %v200
        %vm900 = vcmp.eq.s32.totalorder %v486, %v201
        %vm901 = vcmp.eq.s32.totalorder %v490, %v200
        %vm902 = vcmp.eq.s32.totalorder %v490, %v201
        %vm903 = vcmp.eq.s32.totalorder %v494, %v200
        %vm904 = vcmp.eq.s32.totalorder %v494, %v201
        %vm905 = vcmp.eq.s32.totalorder %v498, %v200
        %vm906 = vcmp.eq.s32.totalorder %v498, %v201
        %vm907 = vcmp.eq.s32.totalorder %v502, %v200
        %vm908 = vcmp.eq.s32.totalorder %v502, %v201
        %vm909 = vcmp.eq.s32.totalorder %v506, %v200
        %vm910 = vcmp.eq.s32.totalorder %v506, %v201
        %vm911 = vcmp.eq.s32.totalorder %v510, %v200
        %vm912 = vcmp.eq.s32.totalorder %v510, %v201
        %vm913 = vcmp.eq.s32.totalorder %v514, %v200
        %vm914 = vcmp.eq.s32.totalorder %v514, %v201
        %vm915 = vcmp.eq.s32.totalorder %v518, %v200
        %vm916 = vcmp.eq.s32.totalorder %v518, %v201
        %vm917 = vcmp.eq.s32.totalorder %v522, %v200
        %vm918 = vcmp.eq.s32.totalorder %v522, %v201
        %vm919 = vcmp.eq.s32.totalorder %v529, %v200
        %vm920 = vcmp.eq.s32.totalorder %v529, %v201
        %vm921 = vcmp.eq.s32.totalorder %v533, %v200
        %vm922 = vcmp.eq.s32.totalorder %v533, %v201
        %vm923 = vcmp.eq.s32.totalorder %v537, %v200
        %vm924 = vcmp.eq.s32.totalorder %v537, %v201
        %vm925 = vcmp.eq.s32.totalorder %v541, %v200
        %vm926 = vcmp.eq.s32.totalorder %v541, %v201
        %vm927 = vcmp.eq.s32.totalorder %v545, %v200
        %vm928 = vcmp.eq.s32.totalorder %v545, %v201
        %vm929 = vcmp.eq.s32.totalorder %v549, %v200
        %vm930 = vcmp.eq.s32.totalorder %v549, %v201
        %vm931 = vcmp.eq.s32.totalorder %v553, %v200
        %vm932 = vcmp.eq.s32.totalorder %v553, %v201
        %vm933 = vcmp.eq.s32.totalorder %v557, %v200
        %vm934 = vcmp.eq.s32.totalorder %v557, %v201
        %vm935 = vcmp.eq.s32.totalorder %v561, %v200
        %vm936 = vcmp.eq.s32.totalorder %v561, %v201
        %vm937 = vcmp.eq.s32.totalorder %v565, %v200
        %vm938 = vcmp.eq.s32.totalorder %v565, %v201
        %vm939 = vcmp.eq.s32.totalorder %v569, %v200
        %vm940 = vcmp.eq.s32.totalorder %v569, %v201
        %vm941 = vcmp.eq.s32.totalorder %v573, %v200
        %vm942 = vcmp.eq.s32.totalorder %v573, %v201
        %vm943 = vcmp.eq.s32.totalorder %v577, %v200
        %vm944 = vcmp.eq.s32.totalorder %v577, %v201
        %vm945 = vcmp.eq.s32.totalorder %v581, %v200
        %vm946 = vcmp.eq.s32.totalorder %v581, %v201
        %vm947 = vcmp.eq.s32.totalorder %v585, %v200
        %vm948 = vcmp.eq.s32.totalorder %v585, %v201
        %vm949 = vcmp.eq.s32.totalorder %v589, %v200
        %vm950 = vcmp.eq.s32.totalorder %v589, %v201
        %vm951 = vcmp.eq.s32.totalorder %v596, %v200
        %vm952 = vcmp.eq.s32.totalorder %v596, %v201
        %vm953 = vcmp.eq.s32.totalorder %v600, %v200
        %vm954 = vcmp.eq.s32.totalorder %v600, %v201
        %vm955 = vcmp.eq.s32.totalorder %v604, %v200
        %vm956 = vcmp.eq.s32.totalorder %v604, %v201
        %vm957 = vcmp.eq.s32.totalorder %v608, %v200
        %vm958 = vcmp.eq.s32.totalorder %v608, %v201
        %vm959 = vcmp.eq.s32.totalorder %v612, %v200
        %vm960 = vcmp.eq.s32.totalorder %v612, %v201
        %vm961 = vcmp.eq.s32.totalorder %v616, %v200
        %vm962 = vcmp.eq.s32.totalorder %v616, %v201
        %vm963 = vcmp.eq.s32.totalorder %v620, %v200
        %vm964 = vcmp.eq.s32.totalorder %v620, %v201
        %vm965 = vcmp.eq.s32.totalorder %v624, %v200
        %vm966 = vcmp.eq.s32.totalorder %v624, %v201
        %vm967 = vcmp.eq.s32.totalorder %v628, %v200
        %vm968 = vcmp.eq.s32.totalorder %v628, %v201
        %vm969 = vcmp.eq.s32.totalorder %v632, %v200
        %vm970 = vcmp.eq.s32.totalorder %v632, %v201
        %vm971 = vcmp.eq.s32.totalorder %v636, %v200
        %vm972 = vcmp.eq.s32.totalorder %v636, %v201
        %vm973 = vcmp.eq.s32.totalorder %v640, %v200
        %vm974 = vcmp.eq.s32.totalorder %v640, %v201
        %vm975 = vcmp.eq.s32.totalorder %v644, %v200
        %vm976 = vcmp.eq.s32.totalorder %v644, %v201
        %vm977 = vcmp.eq.s32.totalorder %v648, %v200
        %vm978 = vcmp.eq.s32.totalorder %v648, %v201
        %vm979 = vcmp.eq.s32.totalorder %v652, %v200
        %vm980 = vcmp.eq.s32.totalorder %v652, %v201
        %vm981 = vcmp.eq.s32.totalorder %v656, %v200
        %vm982 = vcmp.eq.s32.totalorder %v656, %v201
        %vm983 = vcmp.eq.s32.totalorder %v663, %v200
        %vm984 = vcmp.eq.s32.totalorder %v663, %v201
        %vm985 = vcmp.eq.s32.totalorder %v667, %v200
        %vm986 = vcmp.eq.s32.totalorder %v667, %v201
        %vm987 = vcmp.eq.s32.totalorder %v671, %v200
        %vm988 = vcmp.eq.s32.totalorder %v671, %v201
        %vm989 = vcmp.eq.s32.totalorder %v675, %v200
        %vm990 = vcmp.eq.s32.totalorder %v675, %v201
        %vm991 = vcmp.eq.s32.totalorder %v679, %v200
        %vm992 = vcmp.eq.s32.totalorder %v679, %v201
        %vm993 = vcmp.eq.s32.totalorder %v683, %v200
        %vm994 = vcmp.eq.s32.totalorder %v683, %v201
        %vm995 = vcmp.eq.s32.totalorder %v687, %v200
        %vm996 = vcmp.eq.s32.totalorder %v687, %v201
        %vm997 = vcmp.eq.s32.totalorder %v691, %v200
        %vm998 = vcmp.eq.s32.totalorder %v691, %v201
        %vm999 = vcmp.eq.s32.totalorder %v695, %v200
        %vm1000 = vcmp.eq.s32.totalorder %v695, %v201
        %vm1001 = vcmp.eq.s32.totalorder %v699, %v200
        %vm1002 = vcmp.eq.s32.totalorder %v699, %v201
        %vm1003 = vcmp.eq.s32.totalorder %v703, %v200
        %vm1004 = vcmp.eq.s32.totalorder %v703, %v201
        %vm1005 = vcmp.eq.s32.totalorder %v707, %v200
        %vm1006 = vcmp.eq.s32.totalorder %v707, %v201
        %vm1007 = vcmp.eq.s32.totalorder %v711, %v200
        %vm1008 = vcmp.eq.s32.totalorder %v711, %v201
        %vm1009 = vcmp.eq.s32.totalorder %v715, %v200
        %vm1010 = vcmp.eq.s32.totalorder %v715, %v201
        %vm1011 = vcmp.eq.s32.totalorder %v719, %v200
        %vm1012 = vcmp.eq.s32.totalorder %v719, %v201
        %vm1013 = vcmp.eq.s32.totalorder %v723, %v200
        %vm1014 = vcmp.eq.s32.totalorder %v723, %v201
        %vm1015 = vcmp.eq.s32.totalorder %v730, %v200
        %vm1016 = vcmp.eq.s32.totalorder %v730, %v201
        %vm1017 = vcmp.eq.s32.totalorder %v734, %v200
        %vm1018 = vcmp.eq.s32.totalorder %v734, %v201
        %vm1019 = vcmp.eq.s32.totalorder %v738, %v200
        %vm1020 = vcmp.eq.s32.totalorder %v738, %v201
        %vm1021 = vcmp.eq.s32.totalorder %v742, %v200
        %vm1022 = vcmp.eq.s32.totalorder %v742, %v201
        %vm1023 = vcmp.eq.s32.totalorder %v746, %v200
        %vm1024 = vcmp.eq.s32.totalorder %v746, %v201
        %vm1025 = vcmp.eq.s32.totalorder %v750, %v200
        %vm1026 = vcmp.eq.s32.totalorder %v750, %v201
        %vm1027 = vcmp.eq.s32.totalorder %v754, %v200
        %vm1028 = vcmp.eq.s32.totalorder %v754, %v201
        %vm1029 = vcmp.eq.s32.totalorder %v758, %v200
        %vm1030 = vcmp.eq.s32.totalorder %v758, %v201
        %vm1031 = vcmp.eq.s32.totalorder %v762, %v200
        %vm1032 = vcmp.eq.s32.totalorder %v762, %v201
        %vm1033 = vcmp.eq.s32.totalorder %v766, %v200
        %vm1034 = vcmp.eq.s32.totalorder %v766, %v201
        %vm1035 = vcmp.eq.s32.totalorder %v770, %v200
        %vm1036 = vcmp.eq.s32.totalorder %v770, %v201
        %vm1037 = vcmp.eq.s32.totalorder %v774, %v200
        %vm1038 = vcmp.eq.s32.totalorder %v774, %v201
        %vm1039 = vcmp.eq.s32.totalorder %v778, %v200
        %vm1040 = vcmp.eq.s32.totalorder %v778, %v201
        %vm1041 = vcmp.eq.s32.totalorder %v782, %v200
        %vm1042 = vcmp.eq.s32.totalorder %v782, %v201
        %vm1043 = vcmp.eq.s32.totalorder %v786, %v200
        %vm1044 = vcmp.eq.s32.totalorder %v786, %v201
        %vm1045 = vcmp.eq.s32.totalorder %v790, %v200
        %vm1046 = vcmp.eq.s32.totalorder %v790, %v201
        %v1047 = vlaneseq
        %v1048 = vshrl.u32 %v1047, 7
        %v1049 = vsub.s32 0, %v1048
        %v1050 = vrot.slane %v228, %v1049
        %v1051 = vlaneseq
        %v1052 = vshrl.u32 %v1051, 7
        %v1053 = vsub.s32 1, %v1052
        %v1054 = vrot.slane %v228, %v1053
        %v1055 = vlaneseq
        %v1056 = vshrl.u32 %v1055, 7
        %v1057 = vsub.s32 0, %v1056
        %v1058 = vrot.slane %v242, %v1057
        %v1059 = vlaneseq
        %v1060 = vshrl.u32 %v1059, 7
        %v1061 = vsub.s32 1, %v1060
        %v1062 = vrot.slane %v242, %v1061
        %v1063 = vlaneseq
        %v1064 = vshrl.u32 %v1063, 7
        %v1065 = vsub.s32 0, %v1064
        %v1066 = vrot.slane %v250, %v1065
        %v1067 = vlaneseq
        %v1068 = vshrl.u32 %v1067, 7
        %v1069 = vsub.s32 1, %v1068
        %v1070 = vrot.slane %v250, %v1069
        %v1071 = vlaneseq
        %v1072 = vshrl.u32 %v1071, 7
        %v1073 = vsub.s32 0, %v1072
        %v1074 = vrot.slane %v252, %v1073
        %v1075 = vlaneseq
        %v1076 = vshrl.u32 %v1075, 7
        %v1077 = vsub.s32 1, %v1076
        %v1078 = vrot.slane %v252, %v1077
        %v1079 = vlaneseq
        %v1080 = vshrl.u32 %v1079, 7
        %v1081 = vsub.s32 0, %v1080
        %v1082 = vrot.slane %v235, %v1081
        %v1083 = vlaneseq
        %v1084 = vshrl.u32 %v1083, 7
        %v1085 = vsub.s32 1, %v1084
        %v1086 = vrot.slane %v235, %v1085
        %v1087 = vlaneseq
        %v1088 = vshrl.u32 %v1087, 7
        %v1089 = vsub.s32 0, %v1088
        %v1090 = vrot.slane %v249, %v1089
        %v1091 = vlaneseq
        %v1092 = vshrl.u32 %v1091, 7
        %v1093 = vsub.s32 1, %v1092
        %v1094 = vrot.slane %v249, %v1093
        %v1095 = vlaneseq
        %v1096 = vshrl.u32 %v1095, 7
        %v1097 = vsub.s32 0, %v1096
        %v1098 = vrot.slane %v251, %v1097
        %v1099 = vlaneseq
        %v1100 = vshrl.u32 %v1099, 7
        %v1101 = vsub.s32 1, %v1100
        %v1102 = vrot.slane %v251, %v1101
        %v1103 = vlaneseq
        %v1104 = vshrl.u32 %v1103, 7
        %v1105 = vsub.s32 0, %v1104
        %v1106 = vrot.slane %v253, %v1105
        %v1107 = vlaneseq
        %v1108 = vshrl.u32 %v1107, 7
        %v1109 = vsub.s32 1, %v1108
        %v1110 = vrot.slane %v253, %v1109
        %v1127 = vsel %vm791, %v1050, 0.0
        %v1128 = vsel %vm792, %v1054, 0.0
        %v1129 = vsel %vm793, %v1050, 0.0
        %v1130 = vsel %vm794, %v1054, 0.0
        %v1131 = vsel %vm795, %v1050, 0.0
        %v1132 = vsel %vm796, %v1054, 0.0
        %v1133 = vsel %vm797, %v1050, 0.0
        %v1134 = vsel %vm798, %v1054, 0.0
        %v1135 = vsel %vm799, %v1050, 0.0
        %v1136 = vsel %vm800, %v1054, 0.0
        %v1137 = vsel %vm801, %v1050, 0.0
        %v1138 = vsel %vm802, %v1054, 0.0
        %v1139 = vsel %vm803, %v1050, 0.0
        %v1140 = vsel %vm804, %v1054, 0.0
        %v1141 = vsel %vm805, %v1050, 0.0
        %v1142 = vsel %vm806, %v1054, 0.0
        %v1143 = vsel %vm807, %v1050, 0.0
        %v1144 = vsel %vm808, %v1054, 0.0
        %v1145 = vsel %vm809, %v1050, 0.0
        %v1146 = vsel %vm810, %v1054, 0.0
        %v1147 = vsel %vm811, %v1050, 0.0
        %v1148 = vsel %vm812, %v1054, 0.0
        %v1149 = vsel %vm813, %v1050, 0.0
        %v1150 = vsel %vm814, %v1054, 0.0
        %v1151 = vsel %vm815, %v1050, 0.0
        %v1152 = vsel %vm816, %v1054, 0.0
        %v1153 = vsel %vm817, %v1050, 0.0
        %v1154 = vsel %vm818, %v1054, 0.0
        %v1155 = vsel %vm819, %v1050, 0.0
        %v1156 = vsel %vm820, %v1054, 0.0
        %v1157 = vsel %vm821, %v1050, 0.0
        %v1158 = vsel %vm822, %v1054, 0.0
        %v1159 = vsel %vm823, %v1058, 0.0
        %v1160 = vsel %vm824, %v1062, 0.0
        %v1161 = vsel %vm825, %v1058, 0.0
        %v1162 = vsel %vm826, %v1062, 0.0
        %v1163 = vsel %vm827, %v1058, 0.0
        %v1164 = vsel %vm828, %v1062, 0.0
        %v1165 = vsel %vm829, %v1058, 0.0
        %v1166 = vsel %vm830, %v1062, 0.0
        %v1167 = vsel %vm831, %v1058, 0.0
        %v1168 = vsel %vm832, %v1062, 0.0
        %v1169 = vsel %vm833, %v1058, 0.0
        %v1170 = vsel %vm834, %v1062, 0.0
        %v1171 = vsel %vm835, %v1058, 0.0
        %v1172 = vsel %vm836, %v1062, 0.0
        %v1173 = vsel %vm837, %v1058, 0.0
        %v1174 = vsel %vm838, %v1062, 0.0
        %v1175 = vsel %vm839, %v1058, 0.0
        %v1176 = vsel %vm840, %v1062, 0.0
        %v1177 = vsel %vm841, %v1058, 0.0
        %v1178 = vsel %vm842, %v1062, 0.0
        %v1179 = vsel %vm843, %v1058, 0.0
        %v1180 = vsel %vm844, %v1062, 0.0
        %v1181 = vsel %vm845, %v1058, 0.0
        %v1182 = vsel %vm846, %v1062, 0.0
        %v1183 = vsel %vm847, %v1058, 0.0
        %v1184 = vsel %vm848, %v1062, 0.0
        %v1185 = vsel %vm849, %v1058, 0.0
        %v1186 = vsel %vm850, %v1062, 0.0
        %v1187 = vsel %vm851, %v1058, 0.0
        %v1188 = vsel %vm852, %v1062, 0.0
        %v1189 = vsel %vm853, %v1058, 0.0
        %v1190 = vsel %vm854, %v1062, 0.0
        %v1191 = vsel %vm855, %v1066, 0.0
        %v1192 = vsel %vm856, %v1070, 0.0
        %v1193 = vsel %vm857, %v1066, 0.0
        %v1194 = vsel %vm858, %v1070, 0.0
        %v1195 = vsel %vm859, %v1066, 0.0
        %v1196 = vsel %vm860, %v1070, 0.0
        %v1197 = vsel %vm861, %v1066, 0.0
        %v1198 = vsel %vm862, %v1070, 0.0
        %v1199 = vsel %vm863, %v1066, 0.0
        %v1200 = vsel %vm864, %v1070, 0.0
        %v1201 = vsel %vm865, %v1066, 0.0
        %v1202 = vsel %vm866, %v1070, 0.0
        %v1203 = vsel %vm867, %v1066, 0.0
        %v1204 = vsel %vm868, %v1070, 0.0
        %v1205 = vsel %vm869, %v1066, 0.0
        %v1206 = vsel %vm870, %v1070, 0.0
        %v1207 = vsel %vm871, %v1066, 0.0
        %v1208 = vsel %vm872, %v1070, 0.0
        %v1209 = vsel %vm873, %v1066, 0.0
        %v1210 = vsel %vm874, %v1070, 0.0
        %v1211 = vsel %vm875, %v1066, 0.0
        %v1212 = vsel %vm876, %v1070, 0.0
        %v1213 = vsel %vm877, %v1066, 0.0
        %v1214 = vsel %vm878, %v1070, 0.0
        %v1215 = vsel %vm879, %v1066, 0.0
        %v1216 = vsel %vm880, %v1070, 0.0
        %v1217 = vsel %vm881, %v1066, 0.0
        %v1218 = vsel %vm882, %v1070, 0.0
        %v1219 = vsel %vm883, %v1066, 0.0
        %v1220 = vsel %vm884, %v1070, 0.0
        %v1221 = vsel %vm885, %v1066, 0.0
        %v1222 = vsel %vm886, %v1070, 0.0
        %v1223 = vsel %vm887, %v1074, 0.0
        %v1224 = vsel %vm888, %v1078, 0.0
        %v1225 = vsel %vm889, %v1074, 0.0
        %v1226 = vsel %vm890, %v1078, 0.0
        %v1227 = vsel %vm891, %v1074, 0.0
        %v1228 = vsel %vm892, %v1078, 0.0
        %v1229 = vsel %vm893, %v1074, 0.0
        %v1230 = vsel %vm894, %v1078, 0.0
        %v1231 = vsel %vm895, %v1074, 0.0
        %v1232 = vsel %vm896, %v1078, 0.0
        %v1233 = vsel %vm897, %v1074, 0.0
        %v1234 = vsel %vm898, %v1078, 0.0
        %v1235 = vsel %vm899, %v1074, 0.0
        %v1236 = vsel %vm900, %v1078, 0.0
        %v1237 = vsel %vm901, %v1074, 0.0
        %v1238 = vsel %vm902, %v1078, 0.0
        %v1239 = vsel %vm903, %v1074, 0.0
        %v1240 = vsel %vm904, %v1078, 0.0
        %v1241 = vsel %vm905, %v1074, 0.0
        %v1242 = vsel %vm906, %v1078, 0.0
        %v1243 = vsel %vm907, %v1074, 0.0
        %v1244 = vsel %vm908, %v1078, 0.0
        %v1245 = vsel %vm909, %v1074, 0.0
        %v1246 = vsel %vm910, %v1078, 0.0
        %v1247 = vsel %vm911, %v1074, 0.0
        %v1248 = vsel %vm912, %v1078, 0.0
        %v1249 = vsel %vm913, %v1074, 0.0
        %v1250 = vsel %vm914, %v1078, 0.0
        %v1251 = vsel %vm915, %v1074, 0.0
        %v1252 = vsel %vm916, %v1078, 0.0
        %v1253 = vsel %vm917, %v1074, 0.0
        %v1254 = vsel %vm918, %v1078, 0.0
        %v1255 = vsel %vm919, %v1082, 0.0
        %v1256 = vsel %vm920, %v1086, 0.0
        %v1257 = vsel %vm921, %v1082, 0.0
        %v1258 = vsel %vm922, %v1086, 0.0
        %v1259 = vsel %vm923, %v1082, 0.0
        %v1260 = vsel %vm924, %v1086, 0.0
        %v1261 = vsel %vm925, %v1082, 0.0
        %v1262 = vsel %vm926, %v1086, 0.0
        %v1263 = vsel %vm927, %v1082, 0.0
        %v1264 = vsel %vm928, %v1086, 0.0
        %v1265 = vsel %vm929, %v1082, 0.0
        %v1266 = vsel %vm930, %v1086, 0.0
        %v1267 = vsel %vm931, %v1082, 0.0
        %v1268 = vsel %vm932, %v1086, 0.0
        %v1269 = vsel %vm933, %v1082, 0.0
        %v1270 = vsel %vm934, %v1086, 0.0
        %v1271 = vsel %vm935, %v1082, 0.0
        %v1272 = vsel %vm936, %v1086, 0.0
        %v1273 = vsel %vm937, %v1082, 0.0
        %v1274 = vsel %vm938, %v1086, 0.0
        %v1275 = vsel %vm939, %v1082, 0.0
        %v1276 = vsel %vm940, %v1086, 0.0
        %v1277 = vsel %vm941, %v1082, 0.0
        %v1278 = vsel %vm942, %v1086, 0.0
        %v1279 = vsel %vm943, %v1082, 0.0
        %v1280 = vsel %vm944, %v1086, 0.0
        %v1281 = vsel %vm945, %v1082, 0.0
        %v1282 = vsel %vm946, %v1086, 0.0
        %v1283 = vsel %vm947, %v1082, 0.0
        %v1284 = vsel %vm948, %v1086, 0.0
        %v1285 = vsel %vm949, %v1082, 0.0
        %v1286 = vsel %vm950, %v1086, 0.0
        %v1287 = vsel %vm951, %v1090, 0.0
        %v1288 = vsel %vm952, %v1094, 0.0
        %v1289 = vsel %vm953, %v1090, 0.0
        %v1290 = vsel %vm954, %v1094, 0.0
        %v1291 = vsel %vm955, %v1090, 0.0
        %v1292 = vsel %vm956, %v1094, 0.0
        %v1293 = vsel %vm957, %v1090, 0.0
        %v1294 = vsel %vm958, %v1094, 0.0
        %v1295 = vsel %vm959, %v1090, 0.0
        %v1296 = vsel %vm960, %v1094, 0.0
        %v1297 = vsel %vm961, %v1090, 0.0
        %v1298 = vsel %vm962, %v1094, 0.0
        %v1299 = vsel %vm963, %v1090, 0.0
        %v1300 = vsel %vm964, %v1094, 0.0
        %v1301 = vsel %vm965, %v1090, 0.0
        %v1302 = vsel %vm966, %v1094, 0.0
        %v1303 = vsel %vm967, %v1090, 0.0
        %v1304 = vsel %vm968, %v1094, 0.0
        %v1305 = vsel %vm969, %v1090, 0.0
        %v1306 = vsel %vm970, %v1094, 0.0
        %v1307 = vsel %vm971, %v1090, 0.0
        %v1308 = vsel %vm972, %v1094, 0.0
        %v1309 = vsel %vm973, %v1090, 0.0
        %v1310 = vsel %vm974, %v1094, 0.0
        %v1311 = vsel %vm975, %v1090, 0.0
        %v1312 = vsel %vm976, %v1094, 0.0
        %v1313 = vsel %vm977, %v1090, 0.0
        %v1314 = vsel %vm978, %v1094, 0.0
        %v1315 = vsel %vm979, %v1090, 0.0
        %v1316 = vsel %vm980, %v1094, 0.0
        %v1317 = vsel %vm981, %v1090, 0.0
        %v1318 = vsel %vm982, %v1094, 0.0
        %v1319 = vsel %vm983, %v1098, 0.0
        %v1320 = vsel %vm984, %v1102, 0.0
        %v1321 = vsel %vm985, %v1098, 0.0
        %v1322 = vsel %vm986, %v1102, 0.0
        %v1323 = vsel %vm987, %v1098, 0.0
        %v1324 = vsel %vm988, %v1102, 0.0
        %v1325 = vsel %vm989, %v1098, 0.0
        %v1326 = vsel %vm990, %v1102, 0.0
        %v1327 = vsel %vm991, %v1098, 0.0
        %v1328 = vsel %vm992, %v1102, 0.0
        %v1329 = vsel %vm993, %v1098, 0.0
        %v1330 = vsel %vm994, %v1102, 0.0
        %v1331 = vsel %vm995, %v1098, 0.0
        %v1332 = vsel %vm996, %v1102, 0.0
        %v1333 = vsel %vm997, %v1098, 0.0
        %v1334 = vsel %vm998, %v1102, 0.0
        %v1335 = vsel %vm999, %v1098, 0.0
        %v1336 = vsel %vm1000, %v1102, 0.0
        %v1337 = vsel %vm1001, %v1098, 0.0
        %v1338 = vsel %vm1002, %v1102, 0.0
        %v1339 = vsel %vm1003, %v1098, 0.0
        %v1340 = vsel %vm1004, %v1102, 0.0
        %v1341 = vsel %vm1005, %v1098, 0.0
        %v1342 = vsel %vm1006, %v1102, 0.0
        %v1343 = vsel %vm1007, %v1098, 0.0
        %v1344 = vsel %vm1008, %v1102, 0.0
        %v1345 = vsel %vm1009, %v1098, 0.0
        %v1346 = vsel %vm1010, %v1102, 0.0
        %v1347 = vsel %vm1011, %v1098, 0.0
        %v1348 = vsel %vm1012, %v1102, 0.0
        %v1349 = vsel %vm1013, %v1098, 0.0
        %v1350 = vsel %vm1014, %v1102, 0.0
        %v1351 = vsel %vm1015, %v1106, 0.0
        %v1352 = vsel %vm1016, %v1110, 0.0
        %v1353 = vsel %vm1017, %v1106, 0.0
        %v1354 = vsel %vm1018, %v1110, 0.0
        %v1355 = vsel %vm1019, %v1106, 0.0
        %v1356 = vsel %vm1020, %v1110, 0.0
        %v1357 = vsel %vm1021, %v1106, 0.0
        %v1358 = vsel %vm1022, %v1110, 0.0
        %v1359 = vsel %vm1023, %v1106, 0.0
        %v1360 = vsel %vm1024, %v1110, 0.0
        %v1361 = vsel %vm1025, %v1106, 0.0
        %v1362 = vsel %vm1026, %v1110, 0.0
        %v1363 = vsel %vm1027, %v1106, 0.0
        %v1364 = vsel %vm1028, %v1110, 0.0
        %v1365 = vsel %vm1029, %v1106, 0.0
        %v1366 = vsel %vm1030, %v1110, 0.0
        %v1367 = vsel %vm1031, %v1106, 0.0
        %v1368 = vsel %vm1032, %v1110, 0.0
        %v1369 = vsel %vm1033, %v1106, 0.0
        %v1370 = vsel %vm1034, %v1110, 0.0
        %v1371 = vsel %vm1035, %v1106, 0.0
        %v1372 = vsel %vm1036, %v1110, 0.0
        %v1373 = vsel %vm1037, %v1106, 0.0
        %v1374 = vsel %vm1038, %v1110, 0.0
        %v1375 = vsel %vm1039, %v1106, 0.0
        %v1376 = vsel %vm1040, %v1110, 0.0
        %v1377 = vsel %vm1041, %v1106, 0.0
        %v1378 = vsel %vm1042, %v1110, 0.0
        %v1379 = vsel %vm1043, %v1106, 0.0
        %v1380 = vsel %vm1044, %v1110, 0.0
        %v1381 = vsel %vm1045, %v1106, 0.0
        %v1382 = vsel %vm1046, %v1110, 0.0
        %v1383 = vadd.f32 %v1127, %v1128
        %1384 = vadd.xlane.f32.xlu0 %v1383
        %v1385 = vpop.xlane.xlu0 %1384
        %v1386 = vadd.f32 %v1129, %v1130
        %1387 = vadd.xlane.f32.xlu0 %v1386
        %v1388 = vpop.xlane.xlu0 %1387
        %v1389 = vadd.f32 %v1131, %v1132
        %1390 = vadd.xlane.f32.xlu0 %v1389
        %v1391 = vpop.xlane.xlu0 %1390
        %v1392 = vadd.f32 %v1133, %v1134
        %1393 = vadd.xlane.f32.xlu0 %v1392
        %v1394 = vpop.xlane.xlu0 %1393
        %v1395 = vadd.f32 %v1135, %v1136
        %1396 = vadd.xlane.f32.xlu0 %v1395
        %v1397 = vpop.xlane.xlu0 %1396
        %v1398 = vadd.f32 %v1137, %v1138
        %1399 = vadd.xlane.f32.xlu0 %v1398
        %v1400 = vpop.xlane.xlu0 %1399
        %v1401 = vadd.f32 %v1139, %v1140
        %1402 = vadd.xlane.f32.xlu0 %v1401
        %v1403 = vpop.xlane.xlu0 %1402
        %v1404 = vadd.f32 %v1141, %v1142
        %1405 = vadd.xlane.f32.xlu0 %v1404
        %v1406 = vpop.xlane.xlu0 %1405
        %v1407 = vadd.f32 %v1143, %v1144
        %1408 = vadd.xlane.f32.xlu0 %v1407
        %v1409 = vpop.xlane.xlu0 %1408
        %v1410 = vadd.f32 %v1145, %v1146
        %1411 = vadd.xlane.f32.xlu0 %v1410
        %v1412 = vpop.xlane.xlu0 %1411
        %v1413 = vadd.f32 %v1147, %v1148
        %1414 = vadd.xlane.f32.xlu0 %v1413
        %v1415 = vpop.xlane.xlu0 %1414
        %v1416 = vadd.f32 %v1149, %v1150
        %1417 = vadd.xlane.f32.xlu0 %v1416
        %v1418 = vpop.xlane.xlu0 %1417
        %v1419 = vadd.f32 %v1151, %v1152
        %1420 = vadd.xlane.f32.xlu0 %v1419
        %v1421 = vpop.xlane.xlu0 %1420
        %v1422 = vadd.f32 %v1153, %v1154
        %1423 = vadd.xlane.f32.xlu0 %v1422
        %v1424 = vpop.xlane.xlu0 %1423
        %v1425 = vadd.f32 %v1155, %v1156
        %1426 = vadd.xlane.f32.xlu0 %v1425
        %v1427 = vpop.xlane.xlu0 %1426
        %v1428 = vadd.f32 %v1157, %v1158
        %1429 = vadd.xlane.f32.xlu0 %v1428
        %v1430 = vpop.xlane.xlu0 %1429
        %v1431 = vadd.f32 %v1159, %v1160
        %1432 = vadd.xlane.f32.xlu0 %v1431
        %v1433 = vpop.xlane.xlu0 %1432
        %v1434 = vadd.f32 %v1161, %v1162
        %1435 = vadd.xlane.f32.xlu0 %v1434
        %v1436 = vpop.xlane.xlu0 %1435
        %v1437 = vadd.f32 %v1163, %v1164
        %1438 = vadd.xlane.f32.xlu0 %v1437
        %v1439 = vpop.xlane.xlu0 %1438
        %v1440 = vadd.f32 %v1165, %v1166
        %1441 = vadd.xlane.f32.xlu0 %v1440
        %v1442 = vpop.xlane.xlu0 %1441
        %v1443 = vadd.f32 %v1167, %v1168
        %1444 = vadd.xlane.f32.xlu0 %v1443
        %v1445 = vpop.xlane.xlu0 %1444
        %v1446 = vadd.f32 %v1169, %v1170
        %1447 = vadd.xlane.f32.xlu0 %v1446
        %v1448 = vpop.xlane.xlu0 %1447
        %v1449 = vadd.f32 %v1171, %v1172
        %1450 = vadd.xlane.f32.xlu0 %v1449
        %v1451 = vpop.xlane.xlu0 %1450
        %v1452 = vadd.f32 %v1173, %v1174
        %1453 = vadd.xlane.f32.xlu0 %v1452
        %v1454 = vpop.xlane.xlu0 %1453
        %v1455 = vadd.f32 %v1175, %v1176
        %1456 = vadd.xlane.f32.xlu0 %v1455
        %v1457 = vpop.xlane.xlu0 %1456
        %v1458 = vadd.f32 %v1177, %v1178
        %1459 = vadd.xlane.f32.xlu0 %v1458
        %v1460 = vpop.xlane.xlu0 %1459
        %v1461 = vadd.f32 %v1179, %v1180
        %1462 = vadd.xlane.f32.xlu0 %v1461
        %v1463 = vpop.xlane.xlu0 %1462
        %v1464 = vadd.f32 %v1181, %v1182
        %1465 = vadd.xlane.f32.xlu0 %v1464
        %v1466 = vpop.xlane.xlu0 %1465
        %v1467 = vadd.f32 %v1183, %v1184
        %1468 = vadd.xlane.f32.xlu0 %v1467
        %v1469 = vpop.xlane.xlu0 %1468
        %v1470 = vadd.f32 %v1185, %v1186
        %1471 = vadd.xlane.f32.xlu0 %v1470
        %v1472 = vpop.xlane.xlu0 %1471
        %v1473 = vadd.f32 %v1187, %v1188
        %1474 = vadd.xlane.f32.xlu0 %v1473
        %v1475 = vpop.xlane.xlu0 %1474
        %v1476 = vadd.f32 %v1189, %v1190
        %1477 = vadd.xlane.f32.xlu0 %v1476
        %v1478 = vpop.xlane.xlu0 %1477
        %v1479 = vadd.f32 %v1191, %v1192
        %1480 = vadd.xlane.f32.xlu0 %v1479
        %v1481 = vpop.xlane.xlu0 %1480
        %v1482 = vadd.f32 %v1193, %v1194
        %1483 = vadd.xlane.f32.xlu0 %v1482
        %v1484 = vpop.xlane.xlu0 %1483
        %v1485 = vadd.f32 %v1195, %v1196
        %1486 = vadd.xlane.f32.xlu0 %v1485
        %v1487 = vpop.xlane.xlu0 %1486
        %v1488 = vadd.f32 %v1197, %v1198
        %1489 = vadd.xlane.f32.xlu0 %v1488
        %v1490 = vpop.xlane.xlu0 %1489
        %v1491 = vadd.f32 %v1199, %v1200
        %1492 = vadd.xlane.f32.xlu0 %v1491
        %v1493 = vpop.xlane.xlu0 %1492
        %v1494 = vadd.f32 %v1201, %v1202
        %1495 = vadd.xlane.f32.xlu0 %v1494
        %v1496 = vpop.xlane.xlu0 %1495
        %v1497 = vadd.f32 %v1203, %v1204
        %1498 = vadd.xlane.f32.xlu0 %v1497
        %v1499 = vpop.xlane.xlu0 %1498
        %v1500 = vadd.f32 %v1205, %v1206
        %1501 = vadd.xlane.f32.xlu0 %v1500
        %v1502 = vpop.xlane.xlu0 %1501
        %v1503 = vadd.f32 %v1207, %v1208
        %1504 = vadd.xlane.f32.xlu0 %v1503
        %v1505 = vpop.xlane.xlu0 %1504
        %v1506 = vadd.f32 %v1209, %v1210
        %1507 = vadd.xlane.f32.xlu0 %v1506
        %v1508 = vpop.xlane.xlu0 %1507
        %v1509 = vadd.f32 %v1211, %v1212
        %1510 = vadd.xlane.f32.xlu0 %v1509
        %v1511 = vpop.xlane.xlu0 %1510
        %v1512 = vadd.f32 %v1213, %v1214
        %1513 = vadd.xlane.f32.xlu0 %v1512
        %v1514 = vpop.xlane.xlu0 %1513
        %v1515 = vadd.f32 %v1215, %v1216
        %1516 = vadd.xlane.f32.xlu0 %v1515
        %v1517 = vpop.xlane.xlu0 %1516
        %v1518 = vadd.f32 %v1217, %v1218
        %1519 = vadd.xlane.f32.xlu0 %v1518
        %v1520 = vpop.xlane.xlu0 %1519
        %v1521 = vadd.f32 %v1219, %v1220
        %1522 = vadd.xlane.f32.xlu0 %v1521
        %v1523 = vpop.xlane.xlu0 %1522
        %v1524 = vadd.f32 %v1221, %v1222
        %1525 = vadd.xlane.f32.xlu0 %v1524
        %v1526 = vpop.xlane.xlu0 %1525
        %v1527 = vadd.f32 %v1223, %v1224
        %1528 = vadd.xlane.f32.xlu0 %v1527
        %v1529 = vpop.xlane.xlu0 %1528
        %v1530 = vadd.f32 %v1225, %v1226
        %1531 = vadd.xlane.f32.xlu0 %v1530
        %v1532 = vpop.xlane.xlu0 %1531
        %v1533 = vadd.f32 %v1227, %v1228
        %1534 = vadd.xlane.f32.xlu0 %v1533
        %v1535 = vpop.xlane.xlu0 %1534
        %v1536 = vadd.f32 %v1229, %v1230
        %1537 = vadd.xlane.f32.xlu0 %v1536
        %v1538 = vpop.xlane.xlu0 %1537
        %v1539 = vadd.f32 %v1231, %v1232
        %1540 = vadd.xlane.f32.xlu0 %v1539
        %v1541 = vpop.xlane.xlu0 %1540
        %v1542 = vadd.f32 %v1233, %v1234
        %1543 = vadd.xlane.f32.xlu0 %v1542
        %v1544 = vpop.xlane.xlu0 %1543
        %v1545 = vadd.f32 %v1235, %v1236
        %1546 = vadd.xlane.f32.xlu0 %v1545
        %v1547 = vpop.xlane.xlu0 %1546
        %v1548 = vadd.f32 %v1237, %v1238
        %1549 = vadd.xlane.f32.xlu0 %v1548
        %v1550 = vpop.xlane.xlu0 %1549
        %v1551 = vadd.f32 %v1239, %v1240
        %1552 = vadd.xlane.f32.xlu0 %v1551
        %v1553 = vpop.xlane.xlu0 %1552
        %v1554 = vadd.f32 %v1241, %v1242
        %1555 = vadd.xlane.f32.xlu0 %v1554
        %v1556 = vpop.xlane.xlu0 %1555
        %v1557 = vadd.f32 %v1243, %v1244
        %1558 = vadd.xlane.f32.xlu0 %v1557
        %v1559 = vpop.xlane.xlu0 %1558
        %v1560 = vadd.f32 %v1245, %v1246
        %1561 = vadd.xlane.f32.xlu0 %v1560
        %v1562 = vpop.xlane.xlu0 %1561
        %v1563 = vadd.f32 %v1247, %v1248
        %1564 = vadd.xlane.f32.xlu0 %v1563
        %v1565 = vpop.xlane.xlu0 %1564
        %v1566 = vadd.f32 %v1249, %v1250
        %1567 = vadd.xlane.f32.xlu0 %v1566
        %v1568 = vpop.xlane.xlu0 %1567
        %v1569 = vadd.f32 %v1251, %v1252
        %1570 = vadd.xlane.f32.xlu0 %v1569
        %v1571 = vpop.xlane.xlu0 %1570
        %v1572 = vadd.f32 %v1253, %v1254
        %1573 = vadd.xlane.f32.xlu0 %v1572
        %v1574 = vpop.xlane.xlu0 %1573
        %v1575 = vadd.f32 %v1255, %v1256
        %1576 = vadd.xlane.f32.xlu0 %v1575
        %v1577 = vpop.xlane.xlu0 %1576
        %v1578 = vadd.f32 %v1257, %v1258
        %1579 = vadd.xlane.f32.xlu0 %v1578
        %v1580 = vpop.xlane.xlu0 %1579
        %v1581 = vadd.f32 %v1259, %v1260
        %1582 = vadd.xlane.f32.xlu0 %v1581
        %v1583 = vpop.xlane.xlu0 %1582
        %v1584 = vadd.f32 %v1261, %v1262
        %1585 = vadd.xlane.f32.xlu0 %v1584
        %v1586 = vpop.xlane.xlu0 %1585
        %v1587 = vadd.f32 %v1263, %v1264
        %1588 = vadd.xlane.f32.xlu0 %v1587
        %v1589 = vpop.xlane.xlu0 %1588
        %v1590 = vadd.f32 %v1265, %v1266
        %1591 = vadd.xlane.f32.xlu0 %v1590
        %v1592 = vpop.xlane.xlu0 %1591
        %v1593 = vadd.f32 %v1267, %v1268
        %1594 = vadd.xlane.f32.xlu0 %v1593
        %v1595 = vpop.xlane.xlu0 %1594
        %v1596 = vadd.f32 %v1269, %v1270
        %1597 = vadd.xlane.f32.xlu0 %v1596
        %v1598 = vpop.xlane.xlu0 %1597
        %v1599 = vadd.f32 %v1271, %v1272
        %1600 = vadd.xlane.f32.xlu0 %v1599
        %v1601 = vpop.xlane.xlu0 %1600
        %v1602 = vadd.f32 %v1273, %v1274
        %1603 = vadd.xlane.f32.xlu0 %v1602
        %v1604 = vpop.xlane.xlu0 %1603
        %v1605 = vadd.f32 %v1275, %v1276
        %1606 = vadd.xlane.f32.xlu0 %v1605
        %v1607 = vpop.xlane.xlu0 %1606
        %v1608 = vadd.f32 %v1277, %v1278
        %1609 = vadd.xlane.f32.xlu0 %v1608
        %v1610 = vpop.xlane.xlu0 %1609
        %v1611 = vadd.f32 %v1279, %v1280
        %1612 = vadd.xlane.f32.xlu0 %v1611
        %v1613 = vpop.xlane.xlu0 %1612
        %v1614 = vadd.f32 %v1281, %v1282
        %1615 = vadd.xlane.f32.xlu0 %v1614
        %v1616 = vpop.xlane.xlu0 %1615
        %v1617 = vadd.f32 %v1283, %v1284
        %1618 = vadd.xlane.f32.xlu0 %v1617
        %v1619 = vpop.xlane.xlu0 %1618
        %v1620 = vadd.f32 %v1285, %v1286
        %1621 = vadd.xlane.f32.xlu0 %v1620
        %v1622 = vpop.xlane.xlu0 %1621
        %v1623 = vadd.f32 %v1287, %v1288
        %1624 = vadd.xlane.f32.xlu0 %v1623
        %v1625 = vpop.xlane.xlu0 %1624
        %v1626 = vadd.f32 %v1289, %v1290
        %1627 = vadd.xlane.f32.xlu0 %v1626
        %v1628 = vpop.xlane.xlu0 %1627
        %v1629 = vadd.f32 %v1291, %v1292
        %1630 = vadd.xlane.f32.xlu0 %v1629
        %v1631 = vpop.xlane.xlu0 %1630
        %v1632 = vadd.f32 %v1293, %v1294
        %1633 = vadd.xlane.f32.xlu0 %v1632
        %v1634 = vpop.xlane.xlu0 %1633
        %v1635 = vadd.f32 %v1295, %v1296
        %1636 = vadd.xlane.f32.xlu0 %v1635
        %v1637 = vpop.xlane.xlu0 %1636
        %v1638 = vadd.f32 %v1297, %v1298
        %1639 = vadd.xlane.f32.xlu0 %v1638
        %v1640 = vpop.xlane.xlu0 %1639
        %v1641 = vadd.f32 %v1299, %v1300
        %1642 = vadd.xlane.f32.xlu0 %v1641
        %v1643 = vpop.xlane.xlu0 %1642
        %v1644 = vadd.f32 %v1301, %v1302
        %1645 = vadd.xlane.f32.xlu0 %v1644
        %v1646 = vpop.xlane.xlu0 %1645
        %v1647 = vadd.f32 %v1303, %v1304
        %1648 = vadd.xlane.f32.xlu0 %v1647
        %v1649 = vpop.xlane.xlu0 %1648
        %v1650 = vadd.f32 %v1305, %v1306
        %1651 = vadd.xlane.f32.xlu0 %v1650
        %v1652 = vpop.xlane.xlu0 %1651
        %v1653 = vadd.f32 %v1307, %v1308
        %1654 = vadd.xlane.f32.xlu0 %v1653
        %v1655 = vpop.xlane.xlu0 %1654
        %v1656 = vadd.f32 %v1309, %v1310
        %1657 = vadd.xlane.f32.xlu0 %v1656
        %v1658 = vpop.xlane.xlu0 %1657
        %v1659 = vadd.f32 %v1311, %v1312
        %1660 = vadd.xlane.f32.xlu0 %v1659
        %v1661 = vpop.xlane.xlu0 %1660
        %v1662 = vadd.f32 %v1313, %v1314
        %1663 = vadd.xlane.f32.xlu0 %v1662
        %v1664 = vpop.xlane.xlu0 %1663
        %v1665 = vadd.f32 %v1315, %v1316
        %1666 = vadd.xlane.f32.xlu0 %v1665
        %v1667 = vpop.xlane.xlu0 %1666
        %v1668 = vadd.f32 %v1317, %v1318
        %1669 = vadd.xlane.f32.xlu0 %v1668
        %v1670 = vpop.xlane.xlu0 %1669
        %v1671 = vadd.f32 %v1319, %v1320
        %1672 = vadd.xlane.f32.xlu0 %v1671
        %v1673 = vpop.xlane.xlu0 %1672
        %v1674 = vadd.f32 %v1321, %v1322
        %1675 = vadd.xlane.f32.xlu0 %v1674
        %v1676 = vpop.xlane.xlu0 %1675
        %v1677 = vadd.f32 %v1323, %v1324
        %1678 = vadd.xlane.f32.xlu0 %v1677
        %v1679 = vpop.xlane.xlu0 %1678
        %v1680 = vadd.f32 %v1325, %v1326
        %1681 = vadd.xlane.f32.xlu0 %v1680
        %v1682 = vpop.xlane.xlu0 %1681
        %v1683 = vadd.f32 %v1327, %v1328
        %1684 = vadd.xlane.f32.xlu0 %v1683
        %v1685 = vpop.xlane.xlu0 %1684
        %v1686 = vadd.f32 %v1329, %v1330
        %1687 = vadd.xlane.f32.xlu0 %v1686
        %v1688 = vpop.xlane.xlu0 %1687
        %v1689 = vadd.f32 %v1331, %v1332
        %1690 = vadd.xlane.f32.xlu0 %v1689
        %v1691 = vpop.xlane.xlu0 %1690
        %v1692 = vadd.f32 %v1333, %v1334
        %1693 = vadd.xlane.f32.xlu0 %v1692
        %v1694 = vpop.xlane.xlu0 %1693
        %v1695 = vadd.f32 %v1335, %v1336
        %1696 = vadd.xlane.f32.xlu0 %v1695
        %v1697 = vpop.xlane.xlu0 %1696
        %v1698 = vadd.f32 %v1337, %v1338
        %1699 = vadd.xlane.f32.xlu0 %v1698
        %v1700 = vpop.xlane.xlu0 %1699
        %v1701 = vadd.f32 %v1339, %v1340
        %1702 = vadd.xlane.f32.xlu0 %v1701
        %v1703 = vpop.xlane.xlu0 %1702
        %v1704 = vadd.f32 %v1341, %v1342
        %1705 = vadd.xlane.f32.xlu0 %v1704
        %v1706 = vpop.xlane.xlu0 %1705
        %v1707 = vadd.f32 %v1343, %v1344
        %1708 = vadd.xlane.f32.xlu0 %v1707
        %v1709 = vpop.xlane.xlu0 %1708
        %v1710 = vadd.f32 %v1345, %v1346
        %1711 = vadd.xlane.f32.xlu0 %v1710
        %v1712 = vpop.xlane.xlu0 %1711
        %v1713 = vadd.f32 %v1347, %v1348
        %1714 = vadd.xlane.f32.xlu0 %v1713
        %v1715 = vpop.xlane.xlu0 %1714
        %v1716 = vadd.f32 %v1349, %v1350
        %1717 = vadd.xlane.f32.xlu0 %v1716
        %v1718 = vpop.xlane.xlu0 %1717
        %v1719 = vadd.f32 %v1351, %v1352
        %1720 = vadd.xlane.f32.xlu0 %v1719
        %v1721 = vpop.xlane.xlu0 %1720
        %v1722 = vadd.f32 %v1353, %v1354
        %1723 = vadd.xlane.f32.xlu0 %v1722
        %v1724 = vpop.xlane.xlu0 %1723
        %v1725 = vadd.f32 %v1355, %v1356
        %1726 = vadd.xlane.f32.xlu0 %v1725
        %v1727 = vpop.xlane.xlu0 %1726
        %v1728 = vadd.f32 %v1357, %v1358
        %1729 = vadd.xlane.f32.xlu0 %v1728
        %v1730 = vpop.xlane.xlu0 %1729
        %v1731 = vadd.f32 %v1359, %v1360
        %1732 = vadd.xlane.f32.xlu0 %v1731
        %v1733 = vpop.xlane.xlu0 %1732
        %v1734 = vadd.f32 %v1361, %v1362
        %1735 = vadd.xlane.f32.xlu0 %v1734
        %v1736 = vpop.xlane.xlu0 %1735
        %v1737 = vadd.f32 %v1363, %v1364
        %1738 = vadd.xlane.f32.xlu0 %v1737
        %v1739 = vpop.xlane.xlu0 %1738
        %v1740 = vadd.f32 %v1365, %v1366
        %1741 = vadd.xlane.f32.xlu0 %v1740
        %v1742 = vpop.xlane.xlu0 %1741
        %v1743 = vadd.f32 %v1367, %v1368
        %1744 = vadd.xlane.f32.xlu0 %v1743
        %v1745 = vpop.xlane.xlu0 %1744
        %v1746 = vadd.f32 %v1369, %v1370
        %1747 = vadd.xlane.f32.xlu0 %v1746
        %v1748 = vpop.xlane.xlu0 %1747
        %v1749 = vadd.f32 %v1371, %v1372
        %1750 = vadd.xlane.f32.xlu0 %v1749
        %v1751 = vpop.xlane.xlu0 %1750
        %v1752 = vadd.f32 %v1373, %v1374
        %1753 = vadd.xlane.f32.xlu0 %v1752
        %v1754 = vpop.xlane.xlu0 %1753
        %v1755 = vadd.f32 %v1375, %v1376
        %1756 = vadd.xlane.f32.xlu0 %v1755
        %v1757 = vpop.xlane.xlu0 %1756
        %v1758 = vadd.f32 %v1377, %v1378
        %1759 = vadd.xlane.f32.xlu0 %v1758
        %v1760 = vpop.xlane.xlu0 %1759
        %v1761 = vadd.f32 %v1379, %v1380
        %1762 = vadd.xlane.f32.xlu0 %v1761
        %v1763 = vpop.xlane.xlu0 %1762
        %v1764 = vadd.f32 %v1381, %v1382
        %1765 = vadd.xlane.f32.xlu0 %v1764
        %v1766 = vpop.xlane.xlu0 %1765
        %v1895 = vlaneseq
        %v1896 = vshrl.u32 %v1895, 7
        %v1897 = vsub.s32 %v200, %v1896
        %v1898 = vrot.slane %v1385, %v1897
        %v1899 = vadd.s32 %v200, 4294967288
        %v1900 = vlaneseq
        %v1901 = vshrl.u32 %v1900, 7
        %v1902 = vsub.s32 %v1899, %v1901
        %v1903 = vrot.slane %v1388, %v1902
        %vm1904 = vcmask 130112
        %v1905 = vsel %vm1904, %v1903, %v1898
        %v1906 = vadd.s32 %v200, 4294967280
        %v1907 = vlaneseq
        %v1908 = vshrl.u32 %v1907, 7
        %v1909 = vsub.s32 %v1906, %v1908
        %v1910 = vrot.slane %v1391, %v1909
        %vm1911 = vcmask 195712
        %v1912 = vsel %vm1911, %v1910, %v1905
        %v1913 = vadd.s32 %v200, 4294967272
        %v1914 = vlaneseq
        %v1915 = vshrl.u32 %v1914, 7
        %v1916 = vsub.s32 %v1913, %v1915
        %v1917 = vrot.slane %v1394, %v1916
        %vm1918 = vcmask 261312
        %v1919 = vsel %vm1918, %v1917, %v1912
        %v1920 = vadd.s32 %v200, 4294967264
        %v1921 = vlaneseq
        %v1922 = vshrl.u32 %v1921, 7
        %v1923 = vsub.s32 %v1920, %v1922
        %v1924 = vrot.slane %v1397, %v1923
        %vm1925 = vcmask 326912
        %v1926 = vsel %vm1925, %v1924, %v1919
        %v1927 = vadd.s32 %v200, 4294967256
        %v1928 = vlaneseq
        %v1929 = vshrl.u32 %v1928, 7
        %v1930 = vsub.s32 %v1927, %v1929
        %v1931 = vrot.slane %v1400, %v1930
        %vm1932 = vcmask 392512
        %v1933 = vsel %vm1932, %v1931, %v1926
        %v1934 = vadd.s32 %v200, 4294967248
        %v1935 = vlaneseq
        %v1936 = vshrl.u32 %v1935, 7
        %v1937 = vsub.s32 %v1934, %v1936
        %v1938 = vrot.slane %v1403, %v1937
        %vm1939 = vcmask 458112
        %v1940 = vsel %vm1939, %v1938, %v1933
        %v1941 = vadd.s32 %v200, 4294967240
        %v1942 = vlaneseq
        %v1943 = vshrl.u32 %v1942, 7
        %v1944 = vsub.s32 %v1941, %v1943
        %v1945 = vrot.slane %v1406, %v1944
        %vm1946 = vcmask 523712
        %v1947 = vsel %vm1946, %v1945, %v1940
        %v1948 = vadd.s32 %v200, 4294967232
        %v1949 = vlaneseq
        %v1950 = vshrl.u32 %v1949, 7
        %v1951 = vsub.s32 %v1948, %v1950
        %v1952 = vrot.slane %v1409, %v1951
        %vm1953 = vcmask 589312
        %v1954 = vsel %vm1953, %v1952, %v1947
        %v1955 = vadd.s32 %v200, 4294967224
        %v1956 = vlaneseq
        %v1957 = vshrl.u32 %v1956, 7
        %v1958 = vsub.s32 %v1955, %v1957
        %v1959 = vrot.slane %v1412, %v1958
        %vm1960 = vcmask 654912
        %v1961 = vsel %vm1960, %v1959, %v1954
        %v1962 = vadd.s32 %v200, 4294967216
        %v1963 = vlaneseq
        %v1964 = vshrl.u32 %v1963, 7
        %v1965 = vsub.s32 %v1962, %v1964
        %v1966 = vrot.slane %v1415, %v1965
        %vm1967 = vcmask 720512
        %v1968 = vsel %vm1967, %v1966, %v1961
        %v1969 = vadd.s32 %v200, 4294967208
        %v1970 = vlaneseq
        %v1971 = vshrl.u32 %v1970, 7
        %v1972 = vsub.s32 %v1969, %v1971
        %v1973 = vrot.slane %v1418, %v1972
        %vm1974 = vcmask 786112
        %v1975 = vsel %vm1974, %v1973, %v1968
        %v1976 = vadd.s32 %v200, 4294967200
        %v1977 = vlaneseq
        %v1978 = vshrl.u32 %v1977, 7
        %v1979 = vsub.s32 %v1976, %v1978
        %v1980 = vrot.slane %v1421, %v1979
        %vm1981 = vcmask 851712
        %v1982 = vsel %vm1981, %v1980, %v1975
        %v1983 = vadd.s32 %v200, 4294967192
        %v1984 = vlaneseq
        %v1985 = vshrl.u32 %v1984, 7
        %v1986 = vsub.s32 %v1983, %v1985
        %v1987 = vrot.slane %v1424, %v1986
        %vm1988 = vcmask 917312
        %v1989 = vsel %vm1988, %v1987, %v1982
        %v1990 = vadd.s32 %v200, 4294967184
        %v1991 = vlaneseq
        %v1992 = vshrl.u32 %v1991, 7
        %v1993 = vsub.s32 %v1990, %v1992
        %v1994 = vrot.slane %v1427, %v1993
        %vm1995 = vcmask 982912
        %v1996 = vsel %vm1995, %v1994, %v1989
        %v1997 = vadd.s32 %v200, 4294967176
        %v1998 = vlaneseq
        %v1999 = vshrl.u32 %v1998, 7
        %v2000 = vsub.s32 %v1997, %v1999
        %v2001 = vrot.slane %v1430, %v2000
        %vm2002 = vcmask 1048512
        %v2003 = vsel %vm2002, %v2001, %v1996
        %v2004 = vlaneseq
        %v2005 = vshrl.u32 %v2004, 7
        %v2006 = vsub.s32 %v200, %v2005
        %v2007 = vrot.slane %v1433, %v2006
        %v2008 = vlaneseq
        %v2009 = vshrl.u32 %v2008, 7
        %v2010 = vsub.s32 %v1899, %v2009
        %v2011 = vrot.slane %v1436, %v2010
        %v2012 = vsel %vm1904, %v2011, %v2007
        %v2013 = vlaneseq
        %v2014 = vshrl.u32 %v2013, 7
        %v2015 = vsub.s32 %v1906, %v2014
        %v2016 = vrot.slane %v1439, %v2015
        %v2017 = vsel %vm1911, %v2016, %v2012
        %v2018 = vlaneseq
        %v2019 = vshrl.u32 %v2018, 7
        %v2020 = vsub.s32 %v1913, %v2019
        %v2021 = vrot.slane %v1442, %v2020
        %v2022 = vsel %vm1918, %v2021, %v2017
        %v2023 = vlaneseq
        %v2024 = vshrl.u32 %v2023, 7
        %v2025 = vsub.s32 %v1920, %v2024
        %v2026 = vrot.slane %v1445, %v2025
        %v2027 = vsel %vm1925, %v2026, %v2022
        %v2028 = vlaneseq
        %v2029 = vshrl.u32 %v2028, 7
        %v2030 = vsub.s32 %v1927, %v2029
        %v2031 = vrot.slane %v1448, %v2030
        %v2032 = vsel %vm1932, %v2031, %v2027
        %v2033 = vlaneseq
        %v2034 = vshrl.u32 %v2033, 7
        %v2035 = vsub.s32 %v1934, %v2034
        %v2036 = vrot.slane %v1451, %v2035
        %v2037 = vsel %vm1939, %v2036, %v2032
        %v2038 = vlaneseq
        %v2039 = vshrl.u32 %v2038, 7
        %v2040 = vsub.s32 %v1941, %v2039
        %v2041 = vrot.slane %v1454, %v2040
        %v2042 = vsel %vm1946, %v2041, %v2037
        %v2043 = vlaneseq
        %v2044 = vshrl.u32 %v2043, 7
        %v2045 = vsub.s32 %v1948, %v2044
        %v2046 = vrot.slane %v1457, %v2045
        %v2047 = vsel %vm1953, %v2046, %v2042
        %v2048 = vlaneseq
        %v2049 = vshrl.u32 %v2048, 7
        %v2050 = vsub.s32 %v1955, %v2049
        %v2051 = vrot.slane %v1460, %v2050
        %v2052 = vsel %vm1960, %v2051, %v2047
        %v2053 = vlaneseq
        %v2054 = vshrl.u32 %v2053, 7
        %v2055 = vsub.s32 %v1962, %v2054
        %v2056 = vrot.slane %v1463, %v2055
        %v2057 = vsel %vm1967, %v2056, %v2052
        %v2058 = vlaneseq
        %v2059 = vshrl.u32 %v2058, 7
        %v2060 = vsub.s32 %v1969, %v2059
        %v2061 = vrot.slane %v1466, %v2060
        %v2062 = vsel %vm1974, %v2061, %v2057
        %v2063 = vlaneseq
        %v2064 = vshrl.u32 %v2063, 7
        %v2065 = vsub.s32 %v1976, %v2064
        %v2066 = vrot.slane %v1469, %v2065
        %v2067 = vsel %vm1981, %v2066, %v2062
        %v2068 = vlaneseq
        %v2069 = vshrl.u32 %v2068, 7
        %v2070 = vsub.s32 %v1983, %v2069
        %v2071 = vrot.slane %v1472, %v2070
        %v2072 = vsel %vm1988, %v2071, %v2067
        %v2073 = vlaneseq
        %v2074 = vshrl.u32 %v2073, 7
        %v2075 = vsub.s32 %v1990, %v2074
        %v2076 = vrot.slane %v1475, %v2075
        %v2077 = vsel %vm1995, %v2076, %v2072
        %v2078 = vlaneseq
        %v2079 = vshrl.u32 %v2078, 7
        %v2080 = vsub.s32 %v1997, %v2079
        %v2081 = vrot.slane %v1478, %v2080
        %v2082 = vsel %vm2002, %v2081, %v2077
        %v2083 = vlaneseq
        %v2084 = vshrl.u32 %v2083, 7
        %v2085 = vsub.s32 %v200, %v2084
        %v2086 = vrot.slane %v1481, %v2085
        %v2087 = vlaneseq
        %v2088 = vshrl.u32 %v2087, 7
        %v2089 = vsub.s32 %v1899, %v2088
        %v2090 = vrot.slane %v1484, %v2089
        %v2091 = vsel %vm1904, %v2090, %v2086
        %v2092 = vlaneseq
        %v2093 = vshrl.u32 %v2092, 7
        %v2094 = vsub.s32 %v1906, %v2093
        %v2095 = vrot.slane %v1487, %v2094
        %v2096 = vsel %vm1911, %v2095, %v2091
        %v2097 = vlaneseq
        %v2098 = vshrl.u32 %v2097, 7
        %v2099 = vsub.s32 %v1913, %v2098
        %v2100 = vrot.slane %v1490, %v2099
        %v2101 = vsel %vm1918, %v2100, %v2096
        %v2102 = vlaneseq
        %v2103 = vshrl.u32 %v2102, 7
        %v2104 = vsub.s32 %v1920, %v2103
        %v2105 = vrot.slane %v1493, %v2104
        %v2106 = vsel %vm1925, %v2105, %v2101
        %v2107 = vlaneseq
        %v2108 = vshrl.u32 %v2107, 7
        %v2109 = vsub.s32 %v1927, %v2108
        %v2110 = vrot.slane %v1496, %v2109
        %v2111 = vsel %vm1932, %v2110, %v2106
        %v2112 = vlaneseq
        %v2113 = vshrl.u32 %v2112, 7
        %v2114 = vsub.s32 %v1934, %v2113
        %v2115 = vrot.slane %v1499, %v2114
        %v2116 = vsel %vm1939, %v2115, %v2111
        %v2117 = vlaneseq
        %v2118 = vshrl.u32 %v2117, 7
        %v2119 = vsub.s32 %v1941, %v2118
        %v2120 = vrot.slane %v1502, %v2119
        %v2121 = vsel %vm1946, %v2120, %v2116
        %v2122 = vlaneseq
        %v2123 = vshrl.u32 %v2122, 7
        %v2124 = vsub.s32 %v1948, %v2123
        %v2125 = vrot.slane %v1505, %v2124
        %v2126 = vsel %vm1953, %v2125, %v2121
        %v2127 = vlaneseq
        %v2128 = vshrl.u32 %v2127, 7
        %v2129 = vsub.s32 %v1955, %v2128
        %v2130 = vrot.slane %v1508, %v2129
        %v2131 = vsel %vm1960, %v2130, %v2126
        %v2132 = vlaneseq
        %v2133 = vshrl.u32 %v2132, 7
        %v2134 = vsub.s32 %v1962, %v2133
        %v2135 = vrot.slane %v1511, %v2134
        %v2136 = vsel %vm1967, %v2135, %v2131
        %v2137 = vlaneseq
        %v2138 = vshrl.u32 %v2137, 7
        %v2139 = vsub.s32 %v1969, %v2138
        %v2140 = vrot.slane %v1514, %v2139
        %v2141 = vsel %vm1974, %v2140, %v2136
        %v2142 = vlaneseq
        %v2143 = vshrl.u32 %v2142, 7
        %v2144 = vsub.s32 %v1976, %v2143
        %v2145 = vrot.slane %v1517, %v2144
        %v2146 = vsel %vm1981, %v2145, %v2141
        %v2147 = vlaneseq
        %v2148 = vshrl.u32 %v2147, 7
        %v2149 = vsub.s32 %v1983, %v2148
        %v2150 = vrot.slane %v1520, %v2149
        %v2151 = vsel %vm1988, %v2150, %v2146
        %v2152 = vlaneseq
        %v2153 = vshrl.u32 %v2152, 7
        %v2154 = vsub.s32 %v1990, %v2153
        %v2155 = vrot.slane %v1523, %v2154
        %v2156 = vsel %vm1995, %v2155, %v2151
        %v2157 = vlaneseq
        %v2158 = vshrl.u32 %v2157, 7
        %v2159 = vsub.s32 %v1997, %v2158
        %v2160 = vrot.slane %v1526, %v2159
        %v2161 = vsel %vm2002, %v2160, %v2156
        %v2162 = vlaneseq
        %v2163 = vshrl.u32 %v2162, 7
        %v2164 = vsub.s32 %v200, %v2163
        %v2165 = vrot.slane %v1529, %v2164
        %v2166 = vlaneseq
        %v2167 = vshrl.u32 %v2166, 7
        %v2168 = vsub.s32 %v1899, %v2167
        %v2169 = vrot.slane %v1532, %v2168
        %v2170 = vsel %vm1904, %v2169, %v2165
        %v2171 = vlaneseq
        %v2172 = vshrl.u32 %v2171, 7
        %v2173 = vsub.s32 %v1906, %v2172
        %v2174 = vrot.slane %v1535, %v2173
        %v2175 = vsel %vm1911, %v2174, %v2170
        %v2176 = vlaneseq
        %v2177 = vshrl.u32 %v2176, 7
        %v2178 = vsub.s32 %v1913, %v2177
        %v2179 = vrot.slane %v1538, %v2178
        %v2180 = vsel %vm1918, %v2179, %v2175
        %v2181 = vlaneseq
        %v2182 = vshrl.u32 %v2181, 7
        %v2183 = vsub.s32 %v1920, %v2182
        %v2184 = vrot.slane %v1541, %v2183
        %v2185 = vsel %vm1925, %v2184, %v2180
        %v2186 = vlaneseq
        %v2187 = vshrl.u32 %v2186, 7
        %v2188 = vsub.s32 %v1927, %v2187
        %v2189 = vrot.slane %v1544, %v2188
        %v2190 = vsel %vm1932, %v2189, %v2185
        %v2191 = vlaneseq
        %v2192 = vshrl.u32 %v2191, 7
        %v2193 = vsub.s32 %v1934, %v2192
        %v2194 = vrot.slane %v1547, %v2193
        %v2195 = vsel %vm1939, %v2194, %v2190
        %v2196 = vlaneseq
        %v2197 = vshrl.u32 %v2196, 7
        %v2198 = vsub.s32 %v1941, %v2197
        %v2199 = vrot.slane %v1550, %v2198
        %v2200 = vsel %vm1946, %v2199, %v2195
        %v2201 = vlaneseq
        %v2202 = vshrl.u32 %v2201, 7
        %v2203 = vsub.s32 %v1948, %v2202
        %v2204 = vrot.slane %v1553, %v2203
        %v2205 = vsel %vm1953, %v2204, %v2200
        %v2206 = vlaneseq
        %v2207 = vshrl.u32 %v2206, 7
        %v2208 = vsub.s32 %v1955, %v2207
        %v2209 = vrot.slane %v1556, %v2208
        %v2210 = vsel %vm1960, %v2209, %v2205
        %v2211 = vlaneseq
        %v2212 = vshrl.u32 %v2211, 7
        %v2213 = vsub.s32 %v1962, %v2212
        %v2214 = vrot.slane %v1559, %v2213
        %v2215 = vsel %vm1967, %v2214, %v2210
        %v2216 = vlaneseq
        %v2217 = vshrl.u32 %v2216, 7
        %v2218 = vsub.s32 %v1969, %v2217
        %v2219 = vrot.slane %v1562, %v2218
        %v2220 = vsel %vm1974, %v2219, %v2215
        %v2221 = vlaneseq
        %v2222 = vshrl.u32 %v2221, 7
        %v2223 = vsub.s32 %v1976, %v2222
        %v2224 = vrot.slane %v1565, %v2223
        %v2225 = vsel %vm1981, %v2224, %v2220
        %v2226 = vlaneseq
        %v2227 = vshrl.u32 %v2226, 7
        %v2228 = vsub.s32 %v1983, %v2227
        %v2229 = vrot.slane %v1568, %v2228
        %v2230 = vsel %vm1988, %v2229, %v2225
        %v2231 = vlaneseq
        %v2232 = vshrl.u32 %v2231, 7
        %v2233 = vsub.s32 %v1990, %v2232
        %v2234 = vrot.slane %v1571, %v2233
        %v2235 = vsel %vm1995, %v2234, %v2230
        %v2236 = vlaneseq
        %v2237 = vshrl.u32 %v2236, 7
        %v2238 = vsub.s32 %v1997, %v2237
        %v2239 = vrot.slane %v1574, %v2238
        %v2240 = vsel %vm2002, %v2239, %v2235
        %v2241 = vlaneseq
        %v2242 = vshrl.u32 %v2241, 7
        %v2243 = vsub.s32 %v200, %v2242
        %v2244 = vrot.slane %v1577, %v2243
        %v2245 = vlaneseq
        %v2246 = vshrl.u32 %v2245, 7
        %v2247 = vsub.s32 %v1899, %v2246
        %v2248 = vrot.slane %v1580, %v2247
        %v2249 = vsel %vm1904, %v2248, %v2244
        %v2250 = vlaneseq
        %v2251 = vshrl.u32 %v2250, 7
        %v2252 = vsub.s32 %v1906, %v2251
        %v2253 = vrot.slane %v1583, %v2252
        %v2254 = vsel %vm1911, %v2253, %v2249
        %v2255 = vlaneseq
        %v2256 = vshrl.u32 %v2255, 7
        %v2257 = vsub.s32 %v1913, %v2256
        %v2258 = vrot.slane %v1586, %v2257
        %v2259 = vsel %vm1918, %v2258, %v2254
        %v2260 = vlaneseq
        %v2261 = vshrl.u32 %v2260, 7
        %v2262 = vsub.s32 %v1920, %v2261
        %v2263 = vrot.slane %v1589, %v2262
        %v2264 = vsel %vm1925, %v2263, %v2259
        %v2265 = vlaneseq
        %v2266 = vshrl.u32 %v2265, 7
        %v2267 = vsub.s32 %v1927, %v2266
        %v2268 = vrot.slane %v1592, %v2267
        %v2269 = vsel %vm1932, %v2268, %v2264
        %v2270 = vlaneseq
        %v2271 = vshrl.u32 %v2270, 7
        %v2272 = vsub.s32 %v1934, %v2271
        %v2273 = vrot.slane %v1595, %v2272
        %v2274 = vsel %vm1939, %v2273, %v2269
        %v2275 = vlaneseq
        %v2276 = vshrl.u32 %v2275, 7
        %v2277 = vsub.s32 %v1941, %v2276
        %v2278 = vrot.slane %v1598, %v2277
        %v2279 = vsel %vm1946, %v2278, %v2274
        %v2280 = vlaneseq
        %v2281 = vshrl.u32 %v2280, 7
        %v2282 = vsub.s32 %v1948, %v2281
        %v2283 = vrot.slane %v1601, %v2282
        %v2284 = vsel %vm1953, %v2283, %v2279
        %v2285 = vlaneseq
        %v2286 = vshrl.u32 %v2285, 7
        %v2287 = vsub.s32 %v1955, %v2286
        %v2288 = vrot.slane %v1604, %v2287
        %v2289 = vsel %vm1960, %v2288, %v2284
        %v2290 = vlaneseq
        %v2291 = vshrl.u32 %v2290, 7
        %v2292 = vsub.s32 %v1962, %v2291
        %v2293 = vrot.slane %v1607, %v2292
        %v2294 = vsel %vm1967, %v2293, %v2289
        %v2295 = vlaneseq
        %v2296 = vshrl.u32 %v2295, 7
        %v2297 = vsub.s32 %v1969, %v2296
        %v2298 = vrot.slane %v1610, %v2297
        %v2299 = vsel %vm1974, %v2298, %v2294
        %v2300 = vlaneseq
        %v2301 = vshrl.u32 %v2300, 7
        %v2302 = vsub.s32 %v1976, %v2301
        %v2303 = vrot.slane %v1613, %v2302
        %v2304 = vsel %vm1981, %v2303, %v2299
        %v2305 = vlaneseq
        %v2306 = vshrl.u32 %v2305, 7
        %v2307 = vsub.s32 %v1983, %v2306
        %v2308 = vrot.slane %v1616, %v2307
        %v2309 = vsel %vm1988, %v2308, %v2304
        %v2310 = vlaneseq
        %v2311 = vshrl.u32 %v2310, 7
        %v2312 = vsub.s32 %v1990, %v2311
        %v2313 = vrot.slane %v1619, %v2312
        %v2314 = vsel %vm1995, %v2313, %v2309
        %v2315 = vlaneseq
        %v2316 = vshrl.u32 %v2315, 7
        %v2317 = vsub.s32 %v1997, %v2316
        %v2318 = vrot.slane %v1622, %v2317
        %v2319 = vsel %vm2002, %v2318, %v2314
        %v2320 = vlaneseq
        %v2321 = vshrl.u32 %v2320, 7
        %v2322 = vsub.s32 %v200, %v2321
        %v2323 = vrot.slane %v1625, %v2322
        %v2324 = vlaneseq
        %v2325 = vshrl.u32 %v2324, 7
        %v2326 = vsub.s32 %v1899, %v2325
        %v2327 = vrot.slane %v1628, %v2326
        %v2328 = vsel %vm1904, %v2327, %v2323
        %v2329 = vlaneseq
        %v2330 = vshrl.u32 %v2329, 7
        %v2331 = vsub.s32 %v1906, %v2330
        %v2332 = vrot.slane %v1631, %v2331
        %v2333 = vsel %vm1911, %v2332, %v2328
        %v2334 = vlaneseq
        %v2335 = vshrl.u32 %v2334, 7
        %v2336 = vsub.s32 %v1913, %v2335
        %v2337 = vrot.slane %v1634, %v2336
        %v2338 = vsel %vm1918, %v2337, %v2333
        %v2339 = vlaneseq
        %v2340 = vshrl.u32 %v2339, 7
        %v2341 = vsub.s32 %v1920, %v2340
        %v2342 = vrot.slane %v1637, %v2341
        %v2343 = vsel %vm1925, %v2342, %v2338
        %v2344 = vlaneseq
        %v2345 = vshrl.u32 %v2344, 7
        %v2346 = vsub.s32 %v1927, %v2345
        %v2347 = vrot.slane %v1640, %v2346
        %v2348 = vsel %vm1932, %v2347, %v2343
        %v2349 = vlaneseq
        %v2350 = vshrl.u32 %v2349, 7
        %v2351 = vsub.s32 %v1934, %v2350
        %v2352 = vrot.slane %v1643, %v2351
        %v2353 = vsel %vm1939, %v2352, %v2348
        %v2354 = vlaneseq
        %v2355 = vshrl.u32 %v2354, 7
        %v2356 = vsub.s32 %v1941, %v2355
        %v2357 = vrot.slane %v1646, %v2356
        %v2358 = vsel %vm1946, %v2357, %v2353
        %v2359 = vlaneseq
        %v2360 = vshrl.u32 %v2359, 7
        %v2361 = vsub.s32 %v1948, %v2360
        %v2362 = vrot.slane %v1649, %v2361
        %v2363 = vsel %vm1953, %v2362, %v2358
        %v2364 = vlaneseq
        %v2365 = vshrl.u32 %v2364, 7
        %v2366 = vsub.s32 %v1955, %v2365
        %v2367 = vrot.slane %v1652, %v2366
        %v2368 = vsel %vm1960, %v2367, %v2363
        %v2369 = vlaneseq
        %v2370 = vshrl.u32 %v2369, 7
        %v2371 = vsub.s32 %v1962, %v2370
        %v2372 = vrot.slane %v1655, %v2371
        %v2373 = vsel %vm1967, %v2372, %v2368
        %v2374 = vlaneseq
        %v2375 = vshrl.u32 %v2374, 7
        %v2376 = vsub.s32 %v1969, %v2375
        %v2377 = vrot.slane %v1658, %v2376
        %v2378 = vsel %vm1974, %v2377, %v2373
        %v2379 = vlaneseq
        %v2380 = vshrl.u32 %v2379, 7
        %v2381 = vsub.s32 %v1976, %v2380
        %v2382 = vrot.slane %v1661, %v2381
        %v2383 = vsel %vm1981, %v2382, %v2378
        %v2384 = vlaneseq
        %v2385 = vshrl.u32 %v2384, 7
        %v2386 = vsub.s32 %v1983, %v2385
        %v2387 = vrot.slane %v1664, %v2386
        %v2388 = vsel %vm1988, %v2387, %v2383
        %v2389 = vlaneseq
        %v2390 = vshrl.u32 %v2389, 7
        %v2391 = vsub.s32 %v1990, %v2390
        %v2392 = vrot.slane %v1667, %v2391
        %v2393 = vsel %vm1995, %v2392, %v2388
        %v2394 = vlaneseq
        %v2395 = vshrl.u32 %v2394, 7
        %v2396 = vsub.s32 %v1997, %v2395
        %v2397 = vrot.slane %v1670, %v2396
        %v2398 = vsel %vm2002, %v2397, %v2393
        %v2399 = vlaneseq
        %v2400 = vshrl.u32 %v2399, 7
        %v2401 = vsub.s32 %v200, %v2400
        %v2402 = vrot.slane %v1673, %v2401
        %v2403 = vlaneseq
        %v2404 = vshrl.u32 %v2403, 7
        %v2405 = vsub.s32 %v1899, %v2404
        %v2406 = vrot.slane %v1676, %v2405
        %v2407 = vsel %vm1904, %v2406, %v2402
        %v2408 = vlaneseq
        %v2409 = vshrl.u32 %v2408, 7
        %v2410 = vsub.s32 %v1906, %v2409
        %v2411 = vrot.slane %v1679, %v2410
        %v2412 = vsel %vm1911, %v2411, %v2407
        %v2413 = vlaneseq
        %v2414 = vshrl.u32 %v2413, 7
        %v2415 = vsub.s32 %v1913, %v2414
        %v2416 = vrot.slane %v1682, %v2415
        %v2417 = vsel %vm1918, %v2416, %v2412
        %v2418 = vlaneseq
        %v2419 = vshrl.u32 %v2418, 7
        %v2420 = vsub.s32 %v1920, %v2419
        %v2421 = vrot.slane %v1685, %v2420
        %v2422 = vsel %vm1925, %v2421, %v2417
        %v2423 = vlaneseq
        %v2424 = vshrl.u32 %v2423, 7
        %v2425 = vsub.s32 %v1927, %v2424
        %v2426 = vrot.slane %v1688, %v2425
        %v2427 = vsel %vm1932, %v2426, %v2422
        %v2428 = vlaneseq
        %v2429 = vshrl.u32 %v2428, 7
        %v2430 = vsub.s32 %v1934, %v2429
        %v2431 = vrot.slane %v1691, %v2430
        %v2432 = vsel %vm1939, %v2431, %v2427
        %v2433 = vlaneseq
        %v2434 = vshrl.u32 %v2433, 7
        %v2435 = vsub.s32 %v1941, %v2434
        %v2436 = vrot.slane %v1694, %v2435
        %v2437 = vsel %vm1946, %v2436, %v2432
        %v2438 = vlaneseq
        %v2439 = vshrl.u32 %v2438, 7
        %v2440 = vsub.s32 %v1948, %v2439
        %v2441 = vrot.slane %v1697, %v2440
        %v2442 = vsel %vm1953, %v2441, %v2437
        %v2443 = vlaneseq
        %v2444 = vshrl.u32 %v2443, 7
        %v2445 = vsub.s32 %v1955, %v2444
        %v2446 = vrot.slane %v1700, %v2445
        %v2447 = vsel %vm1960, %v2446, %v2442
        %v2448 = vlaneseq
        %v2449 = vshrl.u32 %v2448, 7
        %v2450 = vsub.s32 %v1962, %v2449
        %v2451 = vrot.slane %v1703, %v2450
        %v2452 = vsel %vm1967, %v2451, %v2447
        %v2453 = vlaneseq
        %v2454 = vshrl.u32 %v2453, 7
        %v2455 = vsub.s32 %v1969, %v2454
        %v2456 = vrot.slane %v1706, %v2455
        %v2457 = vsel %vm1974, %v2456, %v2452
        %v2458 = vlaneseq
        %v2459 = vshrl.u32 %v2458, 7
        %v2460 = vsub.s32 %v1976, %v2459
        %v2461 = vrot.slane %v1709, %v2460
        %v2462 = vsel %vm1981, %v2461, %v2457
        %v2463 = vlaneseq
        %v2464 = vshrl.u32 %v2463, 7
        %v2465 = vsub.s32 %v1983, %v2464
        %v2466 = vrot.slane %v1712, %v2465
        %v2467 = vsel %vm1988, %v2466, %v2462
        %v2468 = vlaneseq
        %v2469 = vshrl.u32 %v2468, 7
        %v2470 = vsub.s32 %v1990, %v2469
        %v2471 = vrot.slane %v1715, %v2470
        %v2472 = vsel %vm1995, %v2471, %v2467
        %v2473 = vlaneseq
        %v2474 = vshrl.u32 %v2473, 7
        %v2475 = vsub.s32 %v1997, %v2474
        %v2476 = vrot.slane %v1718, %v2475
        %v2477 = vsel %vm2002, %v2476, %v2472
        %v2478 = vlaneseq
        %v2479 = vshrl.u32 %v2478, 7
        %v2480 = vsub.s32 %v200, %v2479
        %v2481 = vrot.slane %v1721, %v2480
        %v2482 = vlaneseq
        %v2483 = vshrl.u32 %v2482, 7
        %v2484 = vsub.s32 %v1899, %v2483
        %v2485 = vrot.slane %v1724, %v2484
        %v2486 = vsel %vm1904, %v2485, %v2481
        %v2487 = vlaneseq
        %v2488 = vshrl.u32 %v2487, 7
        %v2489 = vsub.s32 %v1906, %v2488
        %v2490 = vrot.slane %v1727, %v2489
        %v2491 = vsel %vm1911, %v2490, %v2486
        %v2492 = vlaneseq
        %v2493 = vshrl.u32 %v2492, 7
        %v2494 = vsub.s32 %v1913, %v2493
        %v2495 = vrot.slane %v1730, %v2494
        %v2496 = vsel %vm1918, %v2495, %v2491
        %v2497 = vlaneseq
        %v2498 = vshrl.u32 %v2497, 7
        %v2499 = vsub.s32 %v1920, %v2498
        %v2500 = vrot.slane %v1733, %v2499
        %v2501 = vsel %vm1925, %v2500, %v2496
        %v2502 = vlaneseq
        %v2503 = vshrl.u32 %v2502, 7
        %v2504 = vsub.s32 %v1927, %v2503
        %v2505 = vrot.slane %v1736, %v2504
        %v2506 = vsel %vm1932, %v2505, %v2501
        %v2507 = vlaneseq
        %v2508 = vshrl.u32 %v2507, 7
        %v2509 = vsub.s32 %v1934, %v2508
        %v2510 = vrot.slane %v1739, %v2509
        %v2511 = vsel %vm1939, %v2510, %v2506
        %v2512 = vlaneseq
        %v2513 = vshrl.u32 %v2512, 7
        %v2514 = vsub.s32 %v1941, %v2513
        %v2515 = vrot.slane %v1742, %v2514
        %v2516 = vsel %vm1946, %v2515, %v2511
        %v2517 = vlaneseq
        %v2518 = vshrl.u32 %v2517, 7
        %v2519 = vsub.s32 %v1948, %v2518
        %v2520 = vrot.slane %v1745, %v2519
        %v2521 = vsel %vm1953, %v2520, %v2516
        %v2522 = vlaneseq
        %v2523 = vshrl.u32 %v2522, 7
        %v2524 = vsub.s32 %v1955, %v2523
        %v2525 = vrot.slane %v1748, %v2524
        %v2526 = vsel %vm1960, %v2525, %v2521
        %v2527 = vlaneseq
        %v2528 = vshrl.u32 %v2527, 7
        %v2529 = vsub.s32 %v1962, %v2528
        %v2530 = vrot.slane %v1751, %v2529
        %v2531 = vsel %vm1967, %v2530, %v2526
        %v2532 = vlaneseq
        %v2533 = vshrl.u32 %v2532, 7
        %v2534 = vsub.s32 %v1969, %v2533
        %v2535 = vrot.slane %v1754, %v2534
        %v2536 = vsel %vm1974, %v2535, %v2531
        %v2537 = vlaneseq
        %v2538 = vshrl.u32 %v2537, 7
        %v2539 = vsub.s32 %v1976, %v2538
        %v2540 = vrot.slane %v1757, %v2539
        %v2541 = vsel %vm1981, %v2540, %v2536
        %v2542 = vlaneseq
        %v2543 = vshrl.u32 %v2542, 7
        %v2544 = vsub.s32 %v1983, %v2543
        %v2545 = vrot.slane %v1760, %v2544
        %v2546 = vsel %vm1988, %v2545, %v2541
        %v2547 = vlaneseq
        %v2548 = vshrl.u32 %v2547, 7
        %v2549 = vsub.s32 %v1990, %v2548
        %v2550 = vrot.slane %v1763, %v2549
        %v2551 = vsel %vm1995, %v2550, %v2546
        %v2552 = vlaneseq
        %v2553 = vshrl.u32 %v2552, 7
        %v2554 = vsub.s32 %v1997, %v2553
        %v2555 = vrot.slane %v1766, %v2554
        %v2556 = vsel %vm2002, %v2555, %v2551
        %vm2557 = vcmask 1041409
        %v2558 = vsel %vm2557, %v2082, %v2003
        %vm2559 = vcmask 1042434
        %v2560 = vsel %vm2559, %v2161, %v2558
        %vm2561 = vcmask 1043459
        %v2562 = vsel %vm2561, %v2240, %v2560
        %vm2563 = vcmask 1044484
        %v2564 = vsel %vm2563, %v2319, %v2562
        %vm2565 = vcmask 1045509
        %v2566 = vsel %vm2565, %v2398, %v2564
        %vm2567 = vcmask 1046534
        %v2568 = vsel %vm2567, %v2477, %v2566
        %vm2569 = vcmask 1047559
        %v2570 = vsel %vm2569, %v2556, %v2568
        %2572 = vst [vmem:[%s196] sm:$0xff] %v2570
        %s2573 = sand.u32 %s82, 1
        %s2574 = scalar_lea.sflag [#allocation4], %s2573
        %s2575 = sand.u32 %s82, 1
        %s2576 = smul.addr %s2575, 8
        %s2577 = scalar_lea.vmem [#allocation7], %s2576
        // Predicated region
        $region37: #{tpu_custom_call.1} parent=27 // pred_check
          %p2578 = pneg %p92
        $region38: #{tpu_custom_call.1} parent=27 // pred_check_branch
          %2580 = sbr.rel (%p2578) target = $region40
        $region39: #{tpu_custom_call.1} parent=27 // pred_region
          %s2582 = ssub.s32 128, 128
          %2583 = vsyncadd %s2574, %s2582
          %s2584 = smul.addr %s22, 128
          %s2585 = scalar_lea.hbm %s2, %s2584
          %s2587 = sshll.u32 %s2577, 4
          %s2588 = int_to_ptr.vmem [resolvable:$true] %s2587
          %2590 = dma.vmem_to_hbm [thread:$0]  %s2588, 128, %s2585, %s2574
        $region40: #{tpu_custom_call.1} parent=27 // pred_fallthru
          _
      $region28: #{tpu_custom_call.1} parent=5 // pred_fallthru
        _
      %p2591 = scmp.le.s32.totalorder 2, %s17
      // Predicated region
      $region41: #{tpu_custom_call.1} parent=5 // pred_check
        %p2592 = pneg %p2591
      $region42: #{tpu_custom_call.1} parent=5 // pred_check_branch
        %2594 = sbr.rel (%p2592) target = $region44
      $region43: #{tpu_custom_call.1} parent=5 // pred_region
        %s2595 = ssub.s32 %s17, 2
        // Predicated region
        $region45: #{tpu_custom_call.1} parent=43 // pred_check
          %p2596 = pneg %p98
        $region46: #{tpu_custom_call.1} parent=43 // pred_check_branch
          %2598 = sbr.rel (%p2596) target = $region48
        $region47: #{tpu_custom_call.1} parent=43 // pred_region
          %s2599 = sand.u32 %s83, 1
          %s2600 = scalar_lea.sflag [#allocation4], %s2599
          %s2601 = sand.u32 %s83, 1
          %s2602 = smul.addr %s2601, 8
          %s2603 = scalar_lea.vmem [#allocation7], %s2602
          %2604 = dma.done %s2600, 128
        $region48: #{tpu_custom_call.1} parent=43 // pred_fallthru
          _
      $region44: #{tpu_custom_call.1} parent=5 // pred_fallthru
        _
    $region6: #{tpu_custom_call.1} parent=1 // loop_footer
      %s21 = sadd.s32 1, %s17
    $region7: #{tpu_custom_call.1} parent=1 // loop_footer_branch
      %16 = sbr.rel target = $region3
    $region8: #{tpu_custom_call.1} parent=1 // loop_exit
      _
    %2605 = vsyncpa [#allocation3], 1
    %s2606 = scalar_lea.sflag [#allocation3], 1
    %2607 = vsyncpa %s2606, 1
    %2608 = vsyncpa [#allocation6], 1
    %s2609 = scalar_lea.sflag [#allocation6], 1
    %2610 = vsyncpa %s2609, 1
    %2611 = vsyncpa [#allocation4], 1
    %s2612 = scalar_lea.sflag [#allocation4], 1
    %2613 = vsyncpa %s2612, 1

</llo_original>
